<compile_context>
chip_gen: v7x
topology: tpu7x:2x2x1
jax: 0.10.0
libtpu: 0.0.40
codegen_flags: <defaults>
</compile_context>

<pallas_src>
import math
from functools import partial

import jax
import jax.numpy as jnp
from jax import lax
from jax.experimental import pallas as pl
from jax.experimental.pallas import tpu as pltpu


def _round_up(x, m):
    return ((x + m - 1) // m) * m


def policy_kernel(
    x_ref,        # [T*BT, D]    compute dtype (bf16), time-major within block
    len_ref,      # [BT, 1]      int32
    sig_ref,      # [BT, Hp]     f32 (zero-padded lanes >= H)
    amask_ref,    # [BT, Ap]     int32 (nonzero == masked; padded actions == 1)
    w_i_ref,      # [D, 3*Hp]    fused, lane-padded input weights (r|z|n)
    w_h_ref,      # [Hp, 3*Hp]   fused, lane-padded hidden weights (r|z|n)
    b_izn_ref,    # [1, 3*Hp]    f32 (b_ir+b_hr | b_iz+b_hz | b_in)
    b_hn_ref,     # [1, Hp]      f32
    w1h_ref,      # [Hp, Hp]     fc1 columns acting on h_last
    w1s_ref,      # [Hp, Hp]     fc1 columns acting on sig
    b1_ref,       # [1, Hp]      f32
    w2_ref,       # [Hp, Ap]
    b2_ref,       # [1, Ap]      f32
    out_ref,      # [BT, Ap]     f32
    xproj_ref,    # VMEM scratch [T*BT, 3*Hp] f32
):
    BT = len_ref.shape[0]
    T = x_ref.shape[0] // BT
    Hp = w_h_ref.shape[0]
    cdt = w_h_ref.dtype      # MXU operand dtype (bf16); activations stay f32.

    # Hoisted input projection for all timesteps: one lane-dense MXU matmul,
    # with the r/z/n input-side biases folded in (removes 3 broadcast-adds
    # per recurrence step).
    xproj_ref[...] = (
        jnp.dot(x_ref[...], w_i_ref[...], preferred_element_type=jnp.float32)
        + b_izn_ref[...]
    )

    w_h = w_h_ref[...]
    b_hn = b_hn_ref[...]
    lens = len_ref[...]                              # [BT, 1] int32

    # GRU recurrence: one fused [BT,Hp]@[Hp,3Hp] MXU op per step; each gate
    # slice is a full 128-lane slab (no sub-vreg lane shuffles).
    def step(t, h):
        row = pl.multiple_of(t * BT, BT)
        xp = xproj_ref[pl.ds(row, BT), :]            # [BT, 3Hp] f32 (biases folded)
        hp = jnp.dot(h.astype(cdt), w_h, preferred_element_type=jnp.float32)
        r = jax.nn.sigmoid(xp[:, 0 * Hp:1 * Hp] + hp[:, 0 * Hp:1 * Hp])
        z = jax.nn.sigmoid(xp[:, 1 * Hp:2 * Hp] + hp[:, 1 * Hp:2 * Hp])
        n = jnp.tanh(xp[:, 2 * Hp:3 * Hp] + r * (hp[:, 2 * Hp:3 * Hp] + b_hn))
        h_new = (1.0 - z) * n + z * h
        # Freeze h once past the sequence end so the final carry is the hidden
        # state at timestep lengths-1 (== x[arange(B), lengths-1] in PyTorch).
        return jnp.where(t < lens, h_new, h)

    h0 = jnp.zeros((BT, Hp), jnp.float32)
    h_last = lax.fori_loop(0, T, step, h0, unroll=True)

    # fc1 over concat([h_last, sig], dim=1) as a split matmul (no in-kernel concat).
    x1 = (jnp.dot(h_last.astype(cdt), w1h_ref[...], preferred_element_type=jnp.float32)
          + jnp.dot(sig_ref[...].astype(cdt), w1s_ref[...], preferred_element_type=jnp.float32)
          + b1_ref[...])
    x1 = jnp.maximum(x1, 0.0)                        # relu

    logits = (jnp.dot(x1.astype(cdt), w2_ref[...], preferred_element_type=jnp.float32)
              + b2_ref[...])

    # Finite large-negative fill (vs -inf): padded action lanes and fully
    # masked rows stay finite; identical result whenever >=1 action is legal.
    masked = jnp.where(amask_ref[...] > 0, jnp.float32(-1e30), logits)
    m = jnp.max(masked, axis=1, keepdims=True)
    e = jnp.exp(masked - m)
    denom = jnp.sum(e, axis=1, keepdims=True)
    # Exact divide (NOT approx reciprocal) so every row sums to 1 in f32.
    out_ref[...] = e / denom


def init_params(key, obs_dim, hidden_dim, action_dim):
    """Deterministic synthetic parameters with PyTorch-style uniform init
    ranges, stored per-gate in the right-multiply layout the wrapper fuses."""
    ks = jax.random.split(key, 17)
    H, D, A = hidden_dim, obs_dim, action_dim
    sg = 1.0 / math.sqrt(H)          # GRU init bound
    s1 = 1.0 / math.sqrt(2 * H)      # fc1 fan-in = 2H
    s2 = 1.0 / math.sqrt(H)          # fc2 fan-in = H
    u = lambda k, shape, s: jax.random.uniform(k, shape, jnp.float32, -s, s)
    return {
        "w_ir": u(ks[0], (D, H), sg), "w_iz": u(ks[1], (D, H), sg), "w_in": u(ks[2], (D, H), sg),
        "w_hr": u(ks[3], (H, H), sg), "w_hz": u(ks[4], (H, H), sg), "w_hn": u(ks[5], (H, H), sg),
        "b_ir": u(ks[6], (1, H), sg), "b_hr": u(ks[7], (1, H), sg),
        "b_iz": u(ks[8], (1, H), sg), "b_hz": u(ks[9], (1, H), sg),
        "b_in": u(ks[10], (1, H), sg), "b_hn": u(ks[11], (1, H), sg),
        "w1h_t": u(ks[12], (H, H), s1),   # fc1 columns acting on h_last
        "w1s_t": u(ks[13], (H, H), s1),   # fc1 columns acting on sig
        "b1": u(ks[14], (1, H), s1),
        "w2_t": u(ks[15], (H, A), s2),
        "b2": u(ks[16], (1, A), s2),
    }


@partial(jax.jit, static_argnames=("compute_dtype",))
def policy_forward(x_padded, lengths, sig, action_mask, p, *, compute_dtype=jnp.bfloat16):
    """x_padded: [B, T, obs_dim] f32, lengths: [B] int32, sig: [B, H] f32,
    action_mask: [B, A] int-like (nonzero == masked). Returns probs [B, A] f32."""
    B, T, D = x_padded.shape
    H = p["w_hr"].shape[0]
    A = p["w2_t"].shape[1]
    cdt = compute_dtype

    LANE = 128
    Hp = _round_up(H, LANE)            # lane-aligned per-gate slab
    Ap = _round_up(A, LANE)            # lane-dense output / softmax
    Bp = max(16, _round_up(B, 16))     # bf16 sublane packing
    if Bp > 128:
        Bp = _round_up(Bp, 128)
        BT = 128                       # batch tile -> grid sharded across TCs
    else:
        BT = Bp
    NB = Bp // BT

    def padrc(w, rows, cols):
        return jnp.pad(w, ((0, rows - w.shape[0]), (0, cols - w.shape[1])))

    # Fused + lane-padded gate weights, column order r|z|n (each gate its own
    # 128-lane slab).  Zero row/column padding keeps the math identical.
    w_i = jnp.concatenate([padrc(p["w_ir"], D, Hp), padrc(p["w_iz"], D, Hp),
                           padrc(p["w_in"], D, Hp)], axis=1).astype(cdt)
    w_h = jnp.concatenate([padrc(p["w_hr"], Hp, Hp), padrc(p["w_hz"], Hp, Hp),
                           padrc(p["w_hn"], Hp, Hp)], axis=1).astype(cdt)
    # r/z biases pre-combined; all three folded into the hoisted projection.
    b_izn = jnp.concatenate([padrc(p["b_ir"] + p["b_hr"], 1, Hp),
                             padrc(p["b_iz"] + p["b_hz"], 1, Hp),
                             padrc(p["b_in"], 1, Hp)], axis=1)
    b_hn = padrc(p["b_hn"], 1, Hp)
    w1h = padrc(p["w1h_t"], Hp, Hp).astype(cdt)
    w1s = padrc(p["w1s_t"], Hp, Hp).astype(cdt)
    b1 = padrc(p["b1"], 1, Hp)
    w2 = padrc(p["w2_t"], Hp, Ap).astype(cdt)
    b2 = padrc(p["b2"], 1, Ap)

    # time-major, batch-padded, grouped by batch tile: [NB, T*BT, D] so the
    # hoisted input projection is one 2-D MXU matmul per grid step and every
    # per-step slice of xproj is sublane-aligned.
    # TODO(synk): fold this transpose/pad into a BlockSpec index_map (stream x
    # over T) instead of materializing the re-laid-out copy in HBM.
    x_t = jnp.transpose(x_padded, (1, 0, 2))                     # [T, B, D]
    x_t = jnp.pad(x_t, ((0, 0), (0, Bp - B), (0, 0)))            # [T, Bp, D]
    x_blk = (x_t.reshape(T, NB, BT, D).transpose(1, 0, 2, 3)
             .reshape(NB, T * BT, D).astype(cdt))

    lens2d = jnp.pad(lengths.astype(jnp.int32), (0, Bp - B)).reshape(Bp, 1)
    sig_p = jnp.pad(sig.astype(jnp.float32), ((0, Bp - B), (0, Hp - H)))
    amask_p = jnp.pad(action_mask.astype(jnp.int32), ((0, Bp - B), (0, Ap - A)),
                      constant_values=1)          # padded actions are masked

    inputs = (x_blk, lens2d, sig_p, amask_p, w_i, w_h, b_izn, b_hn,
              w1h, w1s, b1, w2, b2)

    def whole(shape):   # weight/bias blocks: same full block every grid step
        return pl.BlockSpec(shape, lambda i, _nd=len(shape): (0,) * _nd)

    in_specs = [
        pl.BlockSpec((None, T * BT, D), lambda i: (i, 0, 0)),    # x (batch tile i)
        pl.BlockSpec((BT, 1), lambda i: (i, 0)),                 # lengths
        pl.BlockSpec((BT, Hp), lambda i: (i, 0)),                # sig
        pl.BlockSpec((BT, Ap), lambda i: (i, 0)),                # action mask
        whole((D, 3 * Hp)), whole((Hp, 3 * Hp)),
        whole((1, 3 * Hp)), whole((1, Hp)),
        whole((Hp, Hp)), whole((Hp, Hp)), whole((1, Hp)),
        whole((Hp, Ap)), whole((1, Ap)),
    ]
    out_specs = pl.BlockSpec((BT, Ap), lambda i: (i, 0))

    flops = (2 * T * Bp * D * 3 * Hp           # hoisted input projection
             + 2 * T * Bp * Hp * 3 * Hp        # per-step fused hidden matmul
             + 12 * T * Bp * Hp                # gate elementwise (approx)
             + 2 * Bp * Hp * 2 * Hp            # fc1 (split matmul)
             + 2 * Bp * Hp * Ap                # fc2
             + 6 * Bp * Ap)                    # softmax
    transcendentals = 3 * T * Bp * Hp + Bp * Ap
    bytes_accessed = (sum(int(a.size) * jnp.dtype(a.dtype).itemsize for a in inputs)
                      + Bp * Ap * 4)

    probs_p = pl.pallas_call(
        policy_kernel,
        out_shape=jax.ShapeDtypeStruct((Bp, Ap), jnp.float32),
        grid=(NB,),
        in_specs=in_specs,
        out_specs=out_specs,
        scratch_shapes=[pltpu.VMEM((T * BT, 3 * Hp), jnp.float32)],
        compiler_params=pltpu.CompilerParams(
            dimension_semantics=("parallel",),        # batch tiles across TCs
            vmem_limit_bytes=32 * 1024 * 1024),
        cost_estimate=pl.CostEstimate(
            flops=flops, transcendentals=transcendentals,
            bytes_accessed=bytes_accessed),
    )(*inputs)
    return probs_p[:B, :A]


def ref_forward(x, lengths, sig, amask, p, matmul_dtype=jnp.float32):
    """Pure-JAX reference mirroring the PyTorch forward semantics.
    matmul_dtype lets us also build a numerics-matched (bf16-operand) reference."""
    B, T, D = x.shape
    H = p["w_hr"].shape[0]
    cd = matmul_dtype
    mm = lambda a, b: jnp.dot(a.astype(cd), b.astype(cd),
                              preferred_element_type=jnp.float32)
    w_i = jnp.concatenate([p["w_ir"], p["w_iz"], p["w_in"]], axis=1)
    w_h = jnp.concatenate([p["w_hr"], p["w_hz"], p["w_hn"]], axis=1)
    b_r = p["b_ir"] + p["b_hr"]
    b_z = p["b_iz"] + p["b_hz"]

    def step(h, x_t):
        xp = mm(x_t, w_i)
        hp = mm(h, w_h)
        r = jax.nn.sigmoid(xp[:, :H] + hp[:, :H] + b_r)
        z = jax.nn.sigmoid(xp[:, H:2 * H] + hp[:, H:2 * H] + b_z)
        n = jnp.tanh(xp[:, 2 * H:] + p["b_in"] + r * (hp[:, 2 * H:] + p["b_hn"]))
        h_new = (1.0 - z) * n + z * h
        return h_new, h_new

    h0 = jnp.zeros((B, H), jnp.float32)
    _, hs = lax.scan(step, h0, jnp.transpose(x, (1, 0, 2)))     # [T, B, H]
    hs = jnp.transpose(hs, (1, 0, 2))                           # [B, T, H]
    h_last = hs[jnp.arange(B), lengths - 1]

    x1 = jax.nn.relu(mm(h_last, p["w1h_t"]) + mm(sig, p["w1s_t"]) + p["b1"])
    logits = mm(x1, p["w2_t"]) + p["b2"]
    masked = jnp.where(amask > 0, -jnp.inf, logits)
    return jax.nn.softmax(masked, axis=1)


if __name__ == "__main__":
    B, T, D, H, A = 4, 8, 8, 32, 8     # batch, max seq len, obs_dim, hidden, action_dim
    key = jax.random.PRNGKey(0)
    kx, ks, km, kp = jax.random.split(key, 4)

    x = jax.random.normal(kx, (B, T, D), jnp.float32)
    lengths = jnp.array([8, 5, 3, 1], jnp.int32)
    # emulate pad_sequence: zero out positions past each sequence's length
    tmask = (jnp.arange(T)[None, :] < lengths[:, None]).astype(jnp.float32)
    x = x * tmask[:, :, None]

    sig = jax.random.normal(ks, (B, H), jnp.float32)
    action_mask = jax.random.bernoulli(km, 0.3, (B, A))
    action_mask = action_mask.at[:, 0].set(False)    # keep >=1 legal action per row
    action_mask = action_mask.astype(jnp.int32)

    params = init_params(kp, D, H, A)

    probs = policy_forward(x, lengths, sig, action_mask, params)
    jax.block_until_ready(probs)
    assert probs.shape == (B, A)

    # Numerics-matched reference (same bf16 MXU operands, f32 accumulation).
    ref_matched = ref_forward(x, lengths, sig, action_mask, params,
                              matmul_dtype=jnp.bfloat16)
    assert jnp.allclose(probs, ref_matched, atol=2e-3, rtol=2e-3), (probs, ref_matched)

    # Pure-f32 reference faithful to the PyTorch module (semantic check;
    # looser tolerance absorbs the bf16 operand cast).
    ref_f32 = ref_forward(x, lengths, sig, action_mask, params,
                          matmul_dtype=jnp.float32)
    assert jnp.allclose(probs, ref_f32, atol=2e-2, rtol=2e-2), (probs, ref_f32)

    # Exact softmax normalization (the previous approx-reciprocal version failed this).
    assert jnp.allclose(jnp.sum(probs, axis=1), 1.0, atol=1e-3)

    print("KERNEL_OK")
</pallas_src>

<mosaic_0001>
module attributes {stable_mosaic.version = 11 : i64} {
  func.func @policy_kernel(%arg0: i32, %arg1: memref<1x128x8xbf16, #tpu.memory_space<vmem>>, %arg2: memref<16x1xi32, #tpu.memory_space<vmem>>, %arg3: memref<16x128xf32, #tpu.memory_space<vmem>>, %arg4: memref<16x128xi32, #tpu.memory_space<vmem>>, %arg5: memref<8x384xbf16, #tpu.memory_space<vmem>>, %arg6: memref<128x384xbf16, #tpu.memory_space<vmem>>, %arg7: memref<1x384xf32, #tpu.memory_space<vmem>>, %arg8: memref<1x128xf32, #tpu.memory_space<vmem>>, %arg9: memref<128x128xbf16, #tpu.memory_space<vmem>>, %arg10: memref<128x128xbf16, #tpu.memory_space<vmem>>, %arg11: memref<1x128xf32, #tpu.memory_space<vmem>>, %arg12: memref<128x128xbf16, #tpu.memory_space<vmem>>, %arg13: memref<1x128xf32, #tpu.memory_space<vmem>>, %arg14: memref<16x128xf32, #tpu.memory_space<vmem>>, %arg15: memref<128x384xf32, #tpu.memory_space<vmem>>) attributes {dimension_semantics = [#tpu.dimension_semantics<parallel>], iteration_bounds = array<i64: 1>, scalar_prefetch = 0 : i64, scratch_operands = 1 : i64, tpu.core_type = #tpu.core_type<tc>, window_params = [{transform_indices = @transform_0, window_bounds = array<i64: 1, 128, 8>}, {transform_indices = @transform_1, window_bounds = array<i64: 16, 1>}, {transform_indices = @transform_2, window_bounds = array<i64: 16, 128>}, {transform_indices = @transform_3, window_bounds = array<i64: 16, 128>}, {pipeline_mode = #tpu.pipeline_mode<synchronous>, transform_indices = @transform_4, window_bounds = array<i64: 8, 384>}, {pipeline_mode = #tpu.pipeline_mode<synchronous>, transform_indices = @transform_5, window_bounds = array<i64: 128, 384>}, {pipeline_mode = #tpu.pipeline_mode<synchronous>, transform_indices = @transform_6, window_bounds = array<i64: 1, 384>}, {pipeline_mode = #tpu.pipeline_mode<synchronous>, transform_indices = @transform_7, window_bounds = array<i64: 1, 128>}, {pipeline_mode = #tpu.pipeline_mode<synchronous>, transform_indices = @transform_8, window_bounds = array<i64: 128, 128>}, {pipeline_mode = #tpu.pipeline_mode<synchronous>, transform_indices = @transform_9, window_bounds = array<i64: 128, 128>}, {pipeline_mode = #tpu.pipeline_mode<synchronous>, transform_indices = @transform_10, window_bounds = array<i64: 1, 128>}, {pipeline_mode = #tpu.pipeline_mode<synchronous>, transform_indices = @transform_11, window_bounds = array<i64: 128, 128>}, {pipeline_mode = #tpu.pipeline_mode<synchronous>, transform_indices = @transform_12, window_bounds = array<i64: 1, 128>}, {transform_indices = @transform_13, window_bounds = array<i64: 16, 128>}]} {
    %c0 = arith.constant 0 : index
    %c0_0 = arith.constant 0 : index
    %c0_1 = arith.constant 0 : index
    %0 = vector.load %arg1[%c0, %c0_0, %c0_1] : memref<1x128x8xbf16, #tpu.memory_space<vmem>>, vector<1x128x8xbf16>
    %1 = vector.shape_cast %0 : vector<1x128x8xbf16> to vector<128x8xbf16>
    %c0_2 = arith.constant 0 : index
    %c0_3 = arith.constant 0 : index
    %2 = vector.load %arg5[%c0_2, %c0_3] : memref<8x384xbf16, #tpu.memory_space<vmem>>, vector<8x384xbf16>
    %cst = arith.constant dense<0.000000e+00> : vector<128x384xf32>
    %3 = tpu.matmul %1, %2, %cst {dimension_numbers = #tpu.dot_dimension_numbers<[1], [0], [0], [1], [0, 0, 1, 1], [], []>} : vector<128x8xbf16>, vector<8x384xbf16>, vector<128x384xf32> -> vector<128x384xf32>
    %c0_4 = arith.constant 0 : index
    %c0_5 = arith.constant 0 : index
    %4 = vector.load %arg7[%c0_4, %c0_5] : memref<1x384xf32, #tpu.memory_space<vmem>>, vector<1x384xf32>
    %5 = vector.broadcast %4 : vector<1x384xf32> to vector<128x384xf32>
    %6 = arith.addf %3, %5 : vector<128x384xf32>
    %c0_6 = arith.constant 0 : index
    %c0_7 = arith.constant 0 : index
    %7 = vector.load %arg15[%c0_6, %c0_7] : memref<128x384xf32, #tpu.memory_space<vmem>>, vector<128x384xf32>
    tpu.vector_store %arg15[%c0_6, %c0_7], %6 {strides = array<i32>} : memref<128x384xf32, #tpu.memory_space<vmem>>, vector<128x384xf32>,
    %c0_8 = arith.constant 0 : index
    %c0_9 = arith.constant 0 : index
    %8 = vector.load %arg6[%c0_8, %c0_9] : memref<128x384xbf16, #tpu.memory_space<vmem>>, vector<128x384xbf16>
    %c0_10 = arith.constant 0 : index
    %c0_11 = arith.constant 0 : index
    %9 = vector.load %arg8[%c0_10, %c0_11] : memref<1x128xf32, #tpu.memory_space<vmem>>, vector<1x128xf32>
    %c0_12 = arith.constant 0 : index
    %c0_13 = arith.constant 0 : index
    %10 = vector.load %arg2[%c0_12, %c0_13] : memref<16x1xi32, #tpu.memory_space<vmem>>, vector<16x1xi32>
    %cst_14 = arith.constant 0.000000e+00 : f32
    %11 = vector.broadcast %cst_14 : f32 to vector<16x128xf32>
    %c0_i32 = arith.constant 0 : i32
    %c16_i32 = arith.constant 16 : i32
    %12 = arith.muli %c0_i32, %c16_i32 : i32
    %13 = tpu.assume_multiple %12, 16 : i32
    %14 = arith.index_cast %13 : i32 to index
    %c0_15 = arith.constant 0 : index
    %15 = vector.load %arg15[%14, %c0_15] : memref<128x384xf32, #tpu.memory_space<vmem>>, vector<16x384xf32>
    %16 = arith.truncf %11 : vector<16x128xf32> to vector<16x128xbf16>
    %cst_16 = arith.constant dense<0.000000e+00> : vector<16x384xf32>
    %17 = tpu.matmul %16, %8, %cst_16 {dimension_numbers = #tpu.dot_dimension_numbers<[1], [0], [0], [1], [0, 0, 1, 1], [], []>} : vector<16x128xbf16>, vector<128x384xbf16>, vector<16x384xf32> -> vector<16x384xf32>
    %18 = vector.extract_strided_slice %15 {offsets = [0, 0], sizes = [16, 128], strides = [1, 1]} : vector<16x384xf32> to vector<16x128xf32>
    %19 = vector.extract_strided_slice %17 {offsets = [0, 0], sizes = [16, 128], strides = [1, 1]} : vector<16x384xf32> to vector<16x128xf32>
    %20 = arith.addf %18, %19 : vector<16x128xf32>
    %21 = arith.negf %20 : vector<16x128xf32>
    %22 = math.exp %21 : vector<16x128xf32>
    %cst_17 = arith.constant 1.000000e+00 : f32
    %23 = vector.broadcast %cst_17 : f32 to vector<16x128xf32>
    %24 = arith.addf %23, %22 : vector<16x128xf32>
    %25 = arith.divf %23, %24 : vector<16x128xf32>
    %26 = vector.extract_strided_slice %15 {offsets = [0, 128], sizes = [16, 128], strides = [1, 1]} : vector<16x384xf32> to vector<16x128xf32>
    %27 = vector.extract_strided_slice %17 {offsets = [0, 128], sizes = [16, 128], strides = [1, 1]} : vector<16x384xf32> to vector<16x128xf32>
    %28 = arith.addf %26, %27 : vector<16x128xf32>
    %29 = arith.negf %28 : vector<16x128xf32>
    %30 = math.exp %29 : vector<16x128xf32>
    %cst_18 = arith.constant 1.000000e+00 : f32
    %31 = vector.broadcast %cst_18 : f32 to vector<16x128xf32>
    %32 = arith.addf %31, %30 : vector<16x128xf32>
    %33 = arith.divf %31, %32 : vector<16x128xf32>
    %34 = vector.extract_strided_slice %15 {offsets = [0, 256], sizes = [16, 128], strides = [1, 1]} : vector<16x384xf32> to vector<16x128xf32>
    %35 = vector.extract_strided_slice %17 {offsets = [0, 256], sizes = [16, 128], strides = [1, 1]} : vector<16x384xf32> to vector<16x128xf32>
    %36 = vector.broadcast %9 : vector<1x128xf32> to vector<16x128xf32>
    %37 = arith.addf %35, %36 : vector<16x128xf32>
    %38 = arith.mulf %25, %37 : vector<16x128xf32>
    %39 = arith.addf %34, %38 : vector<16x128xf32>
    %40 = math.tanh %39 : vector<16x128xf32>
    %cst_19 = arith.constant 1.000000e+00 : f32
    %41 = vector.broadcast %cst_19 : f32 to vector<16x128xf32>
    %42 = arith.subf %41, %33 : vector<16x128xf32>
    %43 = arith.mulf %42, %40 : vector<16x128xf32>
    %44 = arith.mulf %33, %11 : vector<16x128xf32>
    %45 = arith.addf %43, %44 : vector<16x128xf32>
    %46 = vector.broadcast %c0_i32 : i32 to vector<16x1xi32>
    %47 = arith.cmpi slt, %46, %10 : vector<16x1xi32>
    %48 = vector.shape_cast %47 : vector<16x1xi1> to vector<16x1xi1>
    %49 = vector.broadcast %48 : vector<16x1xi1> to vector<16x128xi1>
    %50 = arith.select %49, %45, %11 : vector<16x128xi1>, vector<16x128xf32>
    %c1_i32 = arith.constant 1 : i32
    %c16_i32_20 = arith.constant 16 : i32
    %51 = arith.muli %c1_i32, %c16_i32_20 : i32
    %52 = tpu.assume_multiple %51, 16 : i32
    %53 = arith.index_cast %52 : i32 to index
    %c0_21 = arith.constant 0 : index
    %54 = vector.load %arg15[%53, %c0_21] : memref<128x384xf32, #tpu.memory_space<vmem>>, vector<16x384xf32>
    %55 = arith.truncf %50 : vector<16x128xf32> to vector<16x128xbf16>
    %cst_22 = arith.constant dense<0.000000e+00> : vector<16x384xf32>
    %56 = tpu.matmul %55, %8, %cst_22 {dimension_numbers = #tpu.dot_dimension_numbers<[1], [0], [0], [1], [0, 0, 1, 1], [], []>} : vector<16x128xbf16>, vector<128x384xbf16>, vector<16x384xf32> -> vector<16x384xf32>
    %57 = vector.extract_strided_slice %54 {offsets = [0, 0], sizes = [16, 128], strides = [1, 1]} : vector<16x384xf32> to vector<16x128xf32>
    %58 = vector.extract_strided_slice %56 {offsets = [0, 0], sizes = [16, 128], strides = [1, 1]} : vector<16x384xf32> to vector<16x128xf32>
    %59 = arith.addf %57, %58 : vector<16x128xf32>
    %60 = arith.negf %59 : vector<16x128xf32>
    %61 = math.exp %60 : vector<16x128xf32>
    %cst_23 = arith.constant 1.000000e+00 : f32
    %62 = vector.broadcast %cst_23 : f32 to vector<16x128xf32>
    %63 = arith.addf %62, %61 : vector<16x128xf32>
    %64 = arith.divf %62, %63 : vector<16x128xf32>
    %65 = vector.extract_strided_slice %54 {offsets = [0, 128], sizes = [16, 128], strides = [1, 1]} : vector<16x384xf32> to vector<16x128xf32>
    %66 = vector.extract_strided_slice %56 {offsets = [0, 128], sizes = [16, 128], strides = [1, 1]} : vector<16x384xf32> to vector<16x128xf32>
    %67 = arith.addf %65, %66 : vector<16x128xf32>
    %68 = arith.negf %67 : vector<16x128xf32>
    %69 = math.exp %68 : vector<16x128xf32>
    %cst_24 = arith.constant 1.000000e+00 : f32
    %70 = vector.broadcast %cst_24 : f32 to vector<16x128xf32>
    %71 = arith.addf %70, %69 : vector<16x128xf32>
    %72 = arith.divf %70, %71 : vector<16x128xf32>
    %73 = vector.extract_strided_slice %54 {offsets = [0, 256], sizes = [16, 128], strides = [1, 1]} : vector<16x384xf32> to vector<16x128xf32>
    %74 = vector.extract_strided_slice %56 {offsets = [0, 256], sizes = [16, 128], strides = [1, 1]} : vector<16x384xf32> to vector<16x128xf32>
    %75 = vector.broadcast %9 : vector<1x128xf32> to vector<16x128xf32>
    %76 = arith.addf %74, %75 : vector<16x128xf32>
    %77 = arith.mulf %64, %76 : vector<16x128xf32>
    %78 = arith.addf %73, %77 : vector<16x128xf32>
    %79 = math.tanh %78 : vector<16x128xf32>
    %cst_25 = arith.constant 1.000000e+00 : f32
    %80 = vector.broadcast %cst_25 : f32 to vector<16x128xf32>
    %81 = arith.subf %80, %72 : vector<16x128xf32>
    %82 = arith.mulf %81, %79 : vector<16x128xf32>
    %83 = arith.mulf %72, %50 : vector<16x128xf32>
    %84 = arith.addf %82, %83 : vector<16x128xf32>
    %85 = vector.broadcast %c1_i32 : i32 to vector<16x1xi32>
    %86 = arith.cmpi slt, %85, %10 : vector<16x1xi32>
    %87 = vector.shape_cast %86 : vector<16x1xi1> to vector<16x1xi1>
    %88 = vector.broadcast %87 : vector<16x1xi1> to vector<16x128xi1>
    %89 = arith.select %88, %84, %50 : vector<16x128xi1>, vector<16x128xf32>
    %c2_i32 = arith.constant 2 : i32
    %c16_i32_26 = arith.constant 16 : i32
    %90 = arith.muli %c2_i32, %c16_i32_26 : i32
    %91 = tpu.assume_multiple %90, 16 : i32
    %92 = arith.index_cast %91 : i32 to index
    %c0_27 = arith.constant 0 : index
    %93 = vector.load %arg15[%92, %c0_27] : memref<128x384xf32, #tpu.memory_space<vmem>>, vector<16x384xf32>
    %94 = arith.truncf %89 : vector<16x128xf32> to vector<16x128xbf16>
    %cst_28 = arith.constant dense<0.000000e+00> : vector<16x384xf32>
    %95 = tpu.matmul %94, %8, %cst_28 {dimension_numbers = #tpu.dot_dimension_numbers<[1], [0], [0], [1], [0, 0, 1, 1], [], []>} : vector<16x128xbf16>, vector<128x384xbf16>, vector<16x384xf32> -> vector<16x384xf32>
    %96 = vector.extract_strided_slice %93 {offsets = [0, 0], sizes = [16, 128], strides = [1, 1]} : vector<16x384xf32> to vector<16x128xf32>
    %97 = vector.extract_strided_slice %95 {offsets = [0, 0], sizes = [16, 128], strides = [1, 1]} : vector<16x384xf32> to vector<16x128xf32>
    %98 = arith.addf %96, %97 : vector<16x128xf32>
    %99 = arith.negf %98 : vector<16x128xf32>
    %100 = math.exp %99 : vector<16x128xf32>
    %cst_29 = arith.constant 1.000000e+00 : f32
    %101 = vector.broadcast %cst_29 : f32 to vector<16x128xf32>
    %102 = arith.addf %101, %100 : vector<16x128xf32>
    %103 = arith.divf %101, %102 : vector<16x128xf32>
    %104 = vector.extract_strided_slice %93 {offsets = [0, 128], sizes = [16, 128], strides = [1, 1]} : vector<16x384xf32> to vector<16x128xf32>
    %105 = vector.extract_strided_slice %95 {offsets = [0, 128], sizes = [16, 128], strides = [1, 1]} : vector<16x384xf32> to vector<16x128xf32>
    %106 = arith.addf %104, %105 : vector<16x128xf32>
    %107 = arith.negf %106 : vector<16x128xf32>
    %108 = math.exp %107 : vector<16x128xf32>
    %cst_30 = arith.constant 1.000000e+00 : f32
    %109 = vector.broadcast %cst_30 : f32 to vector<16x128xf32>
    %110 = arith.addf %109, %108 : vector<16x128xf32>
    %111 = arith.divf %109, %110 : vector<16x128xf32>
    %112 = vector.extract_strided_slice %93 {offsets = [0, 256], sizes = [16, 128], strides = [1, 1]} : vector<16x384xf32> to vector<16x128xf32>
    %113 = vector.extract_strided_slice %95 {offsets = [0, 256], sizes = [16, 128], strides = [1, 1]} : vector<16x384xf32> to vector<16x128xf32>
    %114 = vector.broadcast %9 : vector<1x128xf32> to vector<16x128xf32>
    %115 = arith.addf %113, %114 : vector<16x128xf32>
    %116 = arith.mulf %103, %115 : vector<16x128xf32>
    %117 = arith.addf %112, %116 : vector<16x128xf32>
    %118 = math.tanh %117 : vector<16x128xf32>
    %cst_31 = arith.constant 1.000000e+00 : f32
    %119 = vector.broadcast %cst_31 : f32 to vector<16x128xf32>
    %120 = arith.subf %119, %111 : vector<16x128xf32>
    %121 = arith.mulf %120, %118 : vector<16x128xf32>
    %122 = arith.mulf %111, %89 : vector<16x128xf32>
    %123 = arith.addf %121, %122 : vector<16x128xf32>
    %124 = vector.broadcast %c2_i32 : i32 to vector<16x1xi32>
    %125 = arith.cmpi slt, %124, %10 : vector<16x1xi32>
    %126 = vector.shape_cast %125 : vector<16x1xi1> to vector<16x1xi1>
    %127 = vector.broadcast %126 : vector<16x1xi1> to vector<16x128xi1>
    %128 = arith.select %127, %123, %89 : vector<16x128xi1>, vector<16x128xf32>
    %c3_i32 = arith.constant 3 : i32
    %c16_i32_32 = arith.constant 16 : i32
    %129 = arith.muli %c3_i32, %c16_i32_32 : i32
    %130 = tpu.assume_multiple %129, 16 : i32
    %131 = arith.index_cast %130 : i32 to index
    %c0_33 = arith.constant 0 : index
    %132 = vector.load %arg15[%131, %c0_33] : memref<128x384xf32, #tpu.memory_space<vmem>>, vector<16x384xf32>
    %133 = arith.truncf %128 : vector<16x128xf32> to vector<16x128xbf16>
    %cst_34 = arith.constant dense<0.000000e+00> : vector<16x384xf32>
    %134 = tpu.matmul %133, %8, %cst_34 {dimension_numbers = #tpu.dot_dimension_numbers<[1], [0], [0], [1], [0, 0, 1, 1], [], []>} : vector<16x128xbf16>, vector<128x384xbf16>, vector<16x384xf32> -> vector<16x384xf32>
    %135 = vector.extract_strided_slice %132 {offsets = [0, 0], sizes = [16, 128], strides = [1, 1]} : vector<16x384xf32> to vector<16x128xf32>
    %136 = vector.extract_strided_slice %134 {offsets = [0, 0], sizes = [16, 128], strides = [1, 1]} : vector<16x384xf32> to vector<16x128xf32>
    %137 = arith.addf %135, %136 : vector<16x128xf32>
    %138 = arith.negf %137 : vector<16x128xf32>
    %139 = math.exp %138 : vector<16x128xf32>
    %cst_35 = arith.constant 1.000000e+00 : f32
    %140 = vector.broadcast %cst_35 : f32 to vector<16x128xf32>
    %141 = arith.addf %140, %139 : vector<16x128xf32>
    %142 = arith.divf %140, %141 : vector<16x128xf32>
    %143 = vector.extract_strided_slice %132 {offsets = [0, 128], sizes = [16, 128], strides = [1, 1]} : vector<16x384xf32> to vector<16x128xf32>
    %144 = vector.extract_strided_slice %134 {offsets = [0, 128], sizes = [16, 128], strides = [1, 1]} : vector<16x384xf32> to vector<16x128xf32>
    %145 = arith.addf %143, %144 : vector<16x128xf32>
    %146 = arith.negf %145 : vector<16x128xf32>
    %147 = math.exp %146 : vector<16x128xf32>
    %cst_36 = arith.constant 1.000000e+00 : f32
    %148 = vector.broadcast %cst_36 : f32 to vector<16x128xf32>
    %149 = arith.addf %148, %147 : vector<16x128xf32>
    %150 = arith.divf %148, %149 : vector<16x128xf32>
    %151 = vector.extract_strided_slice %132 {offsets = [0, 256], sizes = [16, 128], strides = [1, 1]} : vector<16x384xf32> to vector<16x128xf32>
    %152 = vector.extract_strided_slice %134 {offsets = [0, 256], sizes = [16, 128], strides = [1, 1]} : vector<16x384xf32> to vector<16x128xf32>
    %153 = vector.broadcast %9 : vector<1x128xf32> to vector<16x128xf32>
    %154 = arith.addf %152, %153 : vector<16x128xf32>
    %155 = arith.mulf %142, %154 : vector<16x128xf32>
    %156 = arith.addf %151, %155 : vector<16x128xf32>
    %157 = math.tanh %156 : vector<16x128xf32>
    %cst_37 = arith.constant 1.000000e+00 : f32
    %158 = vector.broadcast %cst_37 : f32 to vector<16x128xf32>
    %159 = arith.subf %158, %150 : vector<16x128xf32>
    %160 = arith.mulf %159, %157 : vector<16x128xf32>
    %161 = arith.mulf %150, %128 : vector<16x128xf32>
    %162 = arith.addf %160, %161 : vector<16x128xf32>
    %163 = vector.broadcast %c3_i32 : i32 to vector<16x1xi32>
    %164 = arith.cmpi slt, %163, %10 : vector<16x1xi32>
    %165 = vector.shape_cast %164 : vector<16x1xi1> to vector<16x1xi1>
    %166 = vector.broadcast %165 : vector<16x1xi1> to vector<16x128xi1>
    %167 = arith.select %166, %162, %128 : vector<16x128xi1>, vector<16x128xf32>
    %c4_i32 = arith.constant 4 : i32
    %c16_i32_38 = arith.constant 16 : i32
    %168 = arith.muli %c4_i32, %c16_i32_38 : i32
    %169 = tpu.assume_multiple %168, 16 : i32
    %170 = arith.index_cast %169 : i32 to index
    %c0_39 = arith.constant 0 : index
    %171 = vector.load %arg15[%170, %c0_39] : memref<128x384xf32, #tpu.memory_space<vmem>>, vector<16x384xf32>
    %172 = arith.truncf %167 : vector<16x128xf32> to vector<16x128xbf16>
    %cst_40 = arith.constant dense<0.000000e+00> : vector<16x384xf32>
    %173 = tpu.matmul %172, %8, %cst_40 {dimension_numbers = #tpu.dot_dimension_numbers<[1], [0], [0], [1], [0, 0, 1, 1], [], []>} : vector<16x128xbf16>, vector<128x384xbf16>, vector<16x384xf32> -> vector<16x384xf32>
    %174 = vector.extract_strided_slice %171 {offsets = [0, 0], sizes = [16, 128], strides = [1, 1]} : vector<16x384xf32> to vector<16x128xf32>
    %175 = vector.extract_strided_slice %173 {offsets = [0, 0], sizes = [16, 128], strides = [1, 1]} : vector<16x384xf32> to vector<16x128xf32>
    %176 = arith.addf %174, %175 : vector<16x128xf32>
    %177 = arith.negf %176 : vector<16x128xf32>
    %178 = math.exp %177 : vector<16x128xf32>
    %cst_41 = arith.constant 1.000000e+00 : f32
    %179 = vector.broadcast %cst_41 : f32 to vector<16x128xf32>
    %180 = arith.addf %179, %178 : vector<16x128xf32>
    %181 = arith.divf %179, %180 : vector<16x128xf32>
    %182 = vector.extract_strided_slice %171 {offsets = [0, 128], sizes = [16, 128], strides = [1, 1]} : vector<16x384xf32> to vector<16x128xf32>
    %183 = vector.extract_strided_slice %173 {offsets = [0, 128], sizes = [16, 128], strides = [1, 1]} : vector<16x384xf32> to vector<16x128xf32>
    %184 = arith.addf %182, %183 : vector<16x128xf32>
    %185 = arith.negf %184 : vector<16x128xf32>
    %186 = math.exp %185 : vector<16x128xf32>
    %cst_42 = arith.constant 1.000000e+00 : f32
    %187 = vector.broadcast %cst_42 : f32 to vector<16x128xf32>
    %188 = arith.addf %187, %186 : vector<16x128xf32>
    %189 = arith.divf %187, %188 : vector<16x128xf32>
    %190 = vector.extract_strided_slice %171 {offsets = [0, 256], sizes = [16, 128], strides = [1, 1]} : vector<16x384xf32> to vector<16x128xf32>
    %191 = vector.extract_strided_slice %173 {offsets = [0, 256], sizes = [16, 128], strides = [1, 1]} : vector<16x384xf32> to vector<16x128xf32>
    %192 = vector.broadcast %9 : vector<1x128xf32> to vector<16x128xf32>
    %193 = arith.addf %191, %192 : vector<16x128xf32>
    %194 = arith.mulf %181, %193 : vector<16x128xf32>
    %195 = arith.addf %190, %194 : vector<16x128xf32>
    %196 = math.tanh %195 : vector<16x128xf32>
    %cst_43 = arith.constant 1.000000e+00 : f32
    %197 = vector.broadcast %cst_43 : f32 to vector<16x128xf32>
    %198 = arith.subf %197, %189 : vector<16x128xf32>
    %199 = arith.mulf %198, %196 : vector<16x128xf32>
    %200 = arith.mulf %189, %167 : vector<16x128xf32>
    %201 = arith.addf %199, %200 : vector<16x128xf32>
    %202 = vector.broadcast %c4_i32 : i32 to vector<16x1xi32>
    %203 = arith.cmpi slt, %202, %10 : vector<16x1xi32>
    %204 = vector.shape_cast %203 : vector<16x1xi1> to vector<16x1xi1>
    %205 = vector.broadcast %204 : vector<16x1xi1> to vector<16x128xi1>
    %206 = arith.select %205, %201, %167 : vector<16x128xi1>, vector<16x128xf32>
    %c5_i32 = arith.constant 5 : i32
    %c16_i32_44 = arith.constant 16 : i32
    %207 = arith.muli %c5_i32, %c16_i32_44 : i32
    %208 = tpu.assume_multiple %207, 16 : i32
    %209 = arith.index_cast %208 : i32 to index
    %c0_45 = arith.constant 0 : index
    %210 = vector.load %arg15[%209, %c0_45] : memref<128x384xf32, #tpu.memory_space<vmem>>, vector<16x384xf32>
    %211 = arith.truncf %206 : vector<16x128xf32> to vector<16x128xbf16>
    %cst_46 = arith.constant dense<0.000000e+00> : vector<16x384xf32>
    %212 = tpu.matmul %211, %8, %cst_46 {dimension_numbers = #tpu.dot_dimension_numbers<[1], [0], [0], [1], [0, 0, 1, 1], [], []>} : vector<16x128xbf16>, vector<128x384xbf16>, vector<16x384xf32> -> vector<16x384xf32>
    %213 = vector.extract_strided_slice %210 {offsets = [0, 0], sizes = [16, 128], strides = [1, 1]} : vector<16x384xf32> to vector<16x128xf32>
    %214 = vector.extract_strided_slice %212 {offsets = [0, 0], sizes = [16, 128], strides = [1, 1]} : vector<16x384xf32> to vector<16x128xf32>
    %215 = arith.addf %213, %214 : vector<16x128xf32>
    %216 = arith.negf %215 : vector<16x128xf32>
    %217 = math.exp %216 : vector<16x128xf32>
    %cst_47 = arith.constant 1.000000e+00 : f32
    %218 = vector.broadcast %cst_47 : f32 to vector<16x128xf32>
    %219 = arith.addf %218, %217 : vector<16x128xf32>
    %220 = arith.divf %218, %219 : vector<16x128xf32>
    %221 = vector.extract_strided_slice %210 {offsets = [0, 128], sizes = [16, 128], strides = [1, 1]} : vector<16x384xf32> to vector<16x128xf32>
    %222 = vector.extract_strided_slice %212 {offsets = [0, 128], sizes = [16, 128], strides = [1, 1]} : vector<16x384xf32> to vector<16x128xf32>
    %223 = arith.addf %221, %222 : vector<16x128xf32>
    %224 = arith.negf %223 : vector<16x128xf32>
    %225 = math.exp %224 : vector<16x128xf32>
    %cst_48 = arith.constant 1.000000e+00 : f32
    %226 = vector.broadcast %cst_48 : f32 to vector<16x128xf32>
    %227 = arith.addf %226, %225 : vector<16x128xf32>
    %228 = arith.divf %226, %227 : vector<16x128xf32>
    %229 = vector.extract_strided_slice %210 {offsets = [0, 256], sizes = [16, 128], strides = [1, 1]} : vector<16x384xf32> to vector<16x128xf32>
    %230 = vector.extract_strided_slice %212 {offsets = [0, 256], sizes = [16, 128], strides = [1, 1]} : vector<16x384xf32> to vector<16x128xf32>
    %231 = vector.broadcast %9 : vector<1x128xf32> to vector<16x128xf32>
    %232 = arith.addf %230, %231 : vector<16x128xf32>
    %233 = arith.mulf %220, %232 : vector<16x128xf32>
    %234 = arith.addf %229, %233 : vector<16x128xf32>
    %235 = math.tanh %234 : vector<16x128xf32>
    %cst_49 = arith.constant 1.000000e+00 : f32
    %236 = vector.broadcast %cst_49 : f32 to vector<16x128xf32>
    %237 = arith.subf %236, %228 : vector<16x128xf32>
    %238 = arith.mulf %237, %235 : vector<16x128xf32>
    %239 = arith.mulf %228, %206 : vector<16x128xf32>
    %240 = arith.addf %238, %239 : vector<16x128xf32>
    %241 = vector.broadcast %c5_i32 : i32 to vector<16x1xi32>
    %242 = arith.cmpi slt, %241, %10 : vector<16x1xi32>
    %243 = vector.shape_cast %242 : vector<16x1xi1> to vector<16x1xi1>
    %244 = vector.broadcast %243 : vector<16x1xi1> to vector<16x128xi1>
    %245 = arith.select %244, %240, %206 : vector<16x128xi1>, vector<16x128xf32>
    %c6_i32 = arith.constant 6 : i32
    %c16_i32_50 = arith.constant 16 : i32
    %246 = arith.muli %c6_i32, %c16_i32_50 : i32
    %247 = tpu.assume_multiple %246, 16 : i32
    %248 = arith.index_cast %247 : i32 to index
    %c0_51 = arith.constant 0 : index
    %249 = vector.load %arg15[%248, %c0_51] : memref<128x384xf32, #tpu.memory_space<vmem>>, vector<16x384xf32>
    %250 = arith.truncf %245 : vector<16x128xf32> to vector<16x128xbf16>
    %cst_52 = arith.constant dense<0.000000e+00> : vector<16x384xf32>
    %251 = tpu.matmul %250, %8, %cst_52 {dimension_numbers = #tpu.dot_dimension_numbers<[1], [0], [0], [1], [0, 0, 1, 1], [], []>} : vector<16x128xbf16>, vector<128x384xbf16>, vector<16x384xf32> -> vector<16x384xf32>
    %252 = vector.extract_strided_slice %249 {offsets = [0, 0], sizes = [16, 128], strides = [1, 1]} : vector<16x384xf32> to vector<16x128xf32>
    %253 = vector.extract_strided_slice %251 {offsets = [0, 0], sizes = [16, 128], strides = [1, 1]} : vector<16x384xf32> to vector<16x128xf32>
    %254 = arith.addf %252, %253 : vector<16x128xf32>
    %255 = arith.negf %254 : vector<16x128xf32>
    %256 = math.exp %255 : vector<16x128xf32>
    %cst_53 = arith.constant 1.000000e+00 : f32
    %257 = vector.broadcast %cst_53 : f32 to vector<16x128xf32>
    %258 = arith.addf %257, %256 : vector<16x128xf32>
    %259 = arith.divf %257, %258 : vector<16x128xf32>
    %260 = vector.extract_strided_slice %249 {offsets = [0, 128], sizes = [16, 128], strides = [1, 1]} : vector<16x384xf32> to vector<16x128xf32>
    %261 = vector.extract_strided_slice %251 {offsets = [0, 128], sizes = [16, 128], strides = [1, 1]} : vector<16x384xf32> to vector<16x128xf32>
    %262 = arith.addf %260, %261 : vector<16x128xf32>
    %263 = arith.negf %262 : vector<16x128xf32>
    %264 = math.exp %263 : vector<16x128xf32>
    %cst_54 = arith.constant 1.000000e+00 : f32
    %265 = vector.broadcast %cst_54 : f32 to vector<16x128xf32>
    %266 = arith.addf %265, %264 : vector<16x128xf32>
    %267 = arith.divf %265, %266 : vector<16x128xf32>
    %268 = vector.extract_strided_slice %249 {offsets = [0, 256], sizes = [16, 128], strides = [1, 1]} : vector<16x384xf32> to vector<16x128xf32>
    %269 = vector.extract_strided_slice %251 {offsets = [0, 256], sizes = [16, 128], strides = [1, 1]} : vector<16x384xf32> to vector<16x128xf32>
    %270 = vector.broadcast %9 : vector<1x128xf32> to vector<16x128xf32>
    %271 = arith.addf %269, %270 : vector<16x128xf32>
    %272 = arith.mulf %259, %271 : vector<16x128xf32>
    %273 = arith.addf %268, %272 : vector<16x128xf32>
    %274 = math.tanh %273 : vector<16x128xf32>
    %cst_55 = arith.constant 1.000000e+00 : f32
    %275 = vector.broadcast %cst_55 : f32 to vector<16x128xf32>
    %276 = arith.subf %275, %267 : vector<16x128xf32>
    %277 = arith.mulf %276, %274 : vector<16x128xf32>
    %278 = arith.mulf %267, %245 : vector<16x128xf32>
    %279 = arith.addf %277, %278 : vector<16x128xf32>
    %280 = vector.broadcast %c6_i32 : i32 to vector<16x1xi32>
    %281 = arith.cmpi slt, %280, %10 : vector<16x1xi32>
    %282 = vector.shape_cast %281 : vector<16x1xi1> to vector<16x1xi1>
    %283 = vector.broadcast %282 : vector<16x1xi1> to vector<16x128xi1>
    %284 = arith.select %283, %279, %245 : vector<16x128xi1>, vector<16x128xf32>
    %c7_i32 = arith.constant 7 : i32
    %c16_i32_56 = arith.constant 16 : i32
    %285 = arith.muli %c7_i32, %c16_i32_56 : i32
    %286 = tpu.assume_multiple %285, 16 : i32
    %287 = arith.index_cast %286 : i32 to index
    %c0_57 = arith.constant 0 : index
    %288 = vector.load %arg15[%287, %c0_57] : memref<128x384xf32, #tpu.memory_space<vmem>>, vector<16x384xf32>
    %289 = arith.truncf %284 : vector<16x128xf32> to vector<16x128xbf16>
    %cst_58 = arith.constant dense<0.000000e+00> : vector<16x384xf32>
    %290 = tpu.matmul %289, %8, %cst_58 {dimension_numbers = #tpu.dot_dimension_numbers<[1], [0], [0], [1], [0, 0, 1, 1], [], []>} : vector<16x128xbf16>, vector<128x384xbf16>, vector<16x384xf32> -> vector<16x384xf32>
    %291 = vector.extract_strided_slice %288 {offsets = [0, 0], sizes = [16, 128], strides = [1, 1]} : vector<16x384xf32> to vector<16x128xf32>
    %292 = vector.extract_strided_slice %290 {offsets = [0, 0], sizes = [16, 128], strides = [1, 1]} : vector<16x384xf32> to vector<16x128xf32>
    %293 = arith.addf %291, %292 : vector<16x128xf32>
    %294 = arith.negf %293 : vector<16x128xf32>
    %295 = math.exp %294 : vector<16x128xf32>
    %cst_59 = arith.constant 1.000000e+00 : f32
    %296 = vector.broadcast %cst_59 : f32 to vector<16x128xf32>
    %297 = arith.addf %296, %295 : vector<16x128xf32>
    %298 = arith.divf %296, %297 : vector<16x128xf32>
    %299 = vector.extract_strided_slice %288 {offsets = [0, 128], sizes = [16, 128], strides = [1, 1]} : vector<16x384xf32> to vector<16x128xf32>
    %300 = vector.extract_strided_slice %290 {offsets = [0, 128], sizes = [16, 128], strides = [1, 1]} : vector<16x384xf32> to vector<16x128xf32>
    %301 = arith.addf %299, %300 : vector<16x128xf32>
    %302 = arith.negf %301 : vector<16x128xf32>
    %303 = math.exp %302 : vector<16x128xf32>
    %cst_60 = arith.constant 1.000000e+00 : f32
    %304 = vector.broadcast %cst_60 : f32 to vector<16x128xf32>
    %305 = arith.addf %304, %303 : vector<16x128xf32>
    %306 = arith.divf %304, %305 : vector<16x128xf32>
    %307 = vector.extract_strided_slice %288 {offsets = [0, 256], sizes = [16, 128], strides = [1, 1]} : vector<16x384xf32> to vector<16x128xf32>
    %308 = vector.extract_strided_slice %290 {offsets = [0, 256], sizes = [16, 128], strides = [1, 1]} : vector<16x384xf32> to vector<16x128xf32>
    %309 = vector.broadcast %9 : vector<1x128xf32> to vector<16x128xf32>
    %310 = arith.addf %308, %309 : vector<16x128xf32>
    %311 = arith.mulf %298, %310 : vector<16x128xf32>
    %312 = arith.addf %307, %311 : vector<16x128xf32>
    %313 = math.tanh %312 : vector<16x128xf32>
    %cst_61 = arith.constant 1.000000e+00 : f32
    %314 = vector.broadcast %cst_61 : f32 to vector<16x128xf32>
    %315 = arith.subf %314, %306 : vector<16x128xf32>
    %316 = arith.mulf %315, %313 : vector<16x128xf32>
    %317 = arith.mulf %306, %284 : vector<16x128xf32>
    %318 = arith.addf %316, %317 : vector<16x128xf32>
    %319 = vector.broadcast %c7_i32 : i32 to vector<16x1xi32>
    %320 = arith.cmpi slt, %319, %10 : vector<16x1xi32>
    %321 = vector.shape_cast %320 : vector<16x1xi1> to vector<16x1xi1>
    %322 = vector.broadcast %321 : vector<16x1xi1> to vector<16x128xi1>
    %323 = arith.select %322, %318, %284 : vector<16x128xi1>, vector<16x128xf32>
    %c8_i32 = arith.constant 8 : i32
    %324 = arith.truncf %323 : vector<16x128xf32> to vector<16x128xbf16>
    %c0_62 = arith.constant 0 : index
    %c0_63 = arith.constant 0 : index
    %325 = vector.load %arg9[%c0_62, %c0_63] : memref<128x128xbf16, #tpu.memory_space<vmem>>, vector<128x128xbf16>
    %cst_64 = arith.constant dense<0.000000e+00> : vector<16x128xf32>
    %326 = tpu.matmul %324, %325, %cst_64 {dimension_numbers = #tpu.dot_dimension_numbers<[1], [0], [0], [1], [0, 0, 1, 1], [], []>} : vector<16x128xbf16>, vector<128x128xbf16>, vector<16x128xf32> -> vector<16x128xf32>
    %c0_65 = arith.constant 0 : index
    %c0_66 = arith.constant 0 : index
    %327 = vector.load %arg3[%c0_65, %c0_66] : memref<16x128xf32, #tpu.memory_space<vmem>>, vector<16x128xf32>
    %328 = arith.truncf %327 : vector<16x128xf32> to vector<16x128xbf16>
    %c0_67 = arith.constant 0 : index
    %c0_68 = arith.constant 0 : index
    %329 = vector.load %arg10[%c0_67, %c0_68] : memref<128x128xbf16, #tpu.memory_space<vmem>>, vector<128x128xbf16>
    %cst_69 = arith.constant dense<0.000000e+00> : vector<16x128xf32>
    %330 = tpu.matmul %328, %329, %cst_69 {dimension_numbers = #tpu.dot_dimension_numbers<[1], [0], [0], [1], [0, 0, 1, 1], [], []>} : vector<16x128xbf16>, vector<128x128xbf16>, vector<16x128xf32> -> vector<16x128xf32>
    %331 = arith.addf %326, %330 : vector<16x128xf32>
    %c0_70 = arith.constant 0 : index
    %c0_71 = arith.constant 0 : index
    %332 = vector.load %arg11[%c0_70, %c0_71] : memref<1x128xf32, #tpu.memory_space<vmem>>, vector<1x128xf32>
    %333 = vector.broadcast %332 : vector<1x128xf32> to vector<16x128xf32>
    %334 = arith.addf %331, %333 : vector<16x128xf32>
    %cst_72 = arith.constant 0.000000e+00 : f32
    %335 = vector.broadcast %cst_72 : f32 to vector<16x128xf32>
    %336 = arith.maximumf %334, %335 : vector<16x128xf32>
    %337 = arith.truncf %336 : vector<16x128xf32> to vector<16x128xbf16>
    %c0_73 = arith.constant 0 : index
    %c0_74 = arith.constant 0 : index
    %338 = vector.load %arg12[%c0_73, %c0_74] : memref<128x128xbf16, #tpu.memory_space<vmem>>, vector<128x128xbf16>
    %cst_75 = arith.constant dense<0.000000e+00> : vector<16x128xf32>
    %339 = tpu.matmul %337, %338, %cst_75 {dimension_numbers = #tpu.dot_dimension_numbers<[1], [0], [0], [1], [0, 0, 1, 1], [], []>} : vector<16x128xbf16>, vector<128x128xbf16>, vector<16x128xf32> -> vector<16x128xf32>
    %c0_76 = arith.constant 0 : index
    %c0_77 = arith.constant 0 : index
    %340 = vector.load %arg13[%c0_76, %c0_77] : memref<1x128xf32, #tpu.memory_space<vmem>>, vector<1x128xf32>
    %341 = vector.broadcast %340 : vector<1x128xf32> to vector<16x128xf32>
    %342 = arith.addf %339, %341 : vector<16x128xf32>
    %c0_78 = arith.constant 0 : index
    %c0_79 = arith.constant 0 : index
    %343 = vector.load %arg4[%c0_78, %c0_79] : memref<16x128xi32, #tpu.memory_space<vmem>>, vector<16x128xi32>
    %c0_i32_80 = arith.constant 0 : i32
    %344 = vector.broadcast %c0_i32_80 : i32 to vector<16x128xi32>
    %345 = arith.cmpi sgt, %343, %344 : vector<16x128xi32>
    %cst_81 = arith.constant -1.000000e+30 : f32
    %346 = vector.broadcast %cst_81 : f32 to vector<16x128xf32>
    %347 = arith.select %345, %346, %342 : vector<16x128xi1>, vector<16x128xf32>
    %cst_82 = arith.constant dense<0xFF800000> : vector<16xf32>
    %348 = vector.multi_reduction <maximumf>, %347, %cst_82 [1] : vector<16x128xf32> to vector<16xf32>
    %349 = vector.shape_cast %348 : vector<16xf32> to vector<16x1xf32>
    %350 = vector.broadcast %349 : vector<16x1xf32> to vector<16x128xf32>
    %351 = arith.subf %347, %350 : vector<16x128xf32>
    %352 = math.exp %351 : vector<16x128xf32>
    %cst_83 = arith.constant dense<0.000000e+00> : vector<16xf32>
    %353 = vector.multi_reduction <add>, %352, %cst_83 [1] : vector<16x128xf32> to vector<16xf32>
    %354 = vector.shape_cast %353 : vector<16xf32> to vector<16x1xf32>
    %355 = vector.broadcast %354 : vector<16x1xf32> to vector<16x128xf32>
    %356 = arith.divf %352, %355 : vector<16x128xf32>
    %c0_84 = arith.constant 0 : index
    %c0_85 = arith.constant 0 : index
    %357 = vector.load %arg14[%c0_84, %c0_85] : memref<16x128xf32, #tpu.memory_space<vmem>>, vector<16x128xf32>
    tpu.vector_store %arg14[%c0_84, %c0_85], %356 {strides = array<i32>} : memref<16x128xf32, #tpu.memory_space<vmem>>, vector<16x128xf32>,
    return
  }
  func.func @transform_0(%arg0: i32) -> (i32, i32, i32) {
    %c0_i32 = arith.constant 0 : i32
    %c0_i32_0 = arith.constant 0 : i32
    %c0_i32_1 = arith.constant 0 : i32
    return %arg0, %c0_i32, %c0_i32_0 : i32, i32, i32
  }
  func.func @transform_1(%arg0: i32) -> (i32, i32) {
    %c0_i32 = arith.constant 0 : i32
    %c0_i32_0 = arith.constant 0 : i32
    return %arg0, %c0_i32 : i32, i32
  }
  func.func @transform_2(%arg0: i32) -> (i32, i32) {
    %c0_i32 = arith.constant 0 : i32
    %c0_i32_0 = arith.constant 0 : i32
    return %arg0, %c0_i32 : i32, i32
  }
  func.func @transform_3(%arg0: i32) -> (i32, i32) {
    %c0_i32 = arith.constant 0 : i32
    %c0_i32_0 = arith.constant 0 : i32
    return %arg0, %c0_i32 : i32, i32
  }
  func.func @transform_4(%arg0: i32) -> (i32, i32) {
    %c0_i32 = arith.constant 0 : i32
    %c0_i32_0 = arith.constant 0 : i32
    %c0_i32_1 = arith.constant 0 : i32
    return %c0_i32, %c0_i32_0 : i32, i32
  }
  func.func @transform_5(%arg0: i32) -> (i32, i32) {
    %c0_i32 = arith.constant 0 : i32
    %c0_i32_0 = arith.constant 0 : i32
    %c0_i32_1 = arith.constant 0 : i32
    return %c0_i32, %c0_i32_0 : i32, i32
  }
  func.func @transform_6(%arg0: i32) -> (i32, i32) {
    %c0_i32 = arith.constant 0 : i32
    %c0_i32_0 = arith.constant 0 : i32
    %c0_i32_1 = arith.constant 0 : i32
    return %c0_i32, %c0_i32_0 : i32, i32
  }
  func.func @transform_7(%arg0: i32) -> (i32, i32) {
    %c0_i32 = arith.constant 0 : i32
    %c0_i32_0 = arith.constant 0 : i32
    %c0_i32_1 = arith.constant 0 : i32
    return %c0_i32, %c0_i32_0 : i32, i32
  }
  func.func @transform_8(%arg0: i32) -> (i32, i32) {
    %c0_i32 = arith.constant 0 : i32
    %c0_i32_0 = arith.constant 0 : i32
    %c0_i32_1 = arith.constant 0 : i32
    return %c0_i32, %c0_i32_0 : i32, i32
  }
  func.func @transform_9(%arg0: i32) -> (i32, i32) {
    %c0_i32 = arith.constant 0 : i32
    %c0_i32_0 = arith.constant 0 : i32
    %c0_i32_1 = arith.constant 0 : i32
    return %c0_i32, %c0_i32_0 : i32, i32
  }
  func.func @transform_10(%arg0: i32) -> (i32, i32) {
    %c0_i32 = arith.constant 0 : i32
    %c0_i32_0 = arith.constant 0 : i32
    %c0_i32_1 = arith.constant 0 : i32
    return %c0_i32, %c0_i32_0 : i32, i32
  }
  func.func @transform_11(%arg0: i32) -> (i32, i32) {
    %c0_i32 = arith.constant 0 : i32
    %c0_i32_0 = arith.constant 0 : i32
    %c0_i32_1 = arith.constant 0 : i32
    return %c0_i32, %c0_i32_0 : i32, i32
  }
  func.func @transform_12(%arg0: i32) -> (i32, i32) {
    %c0_i32 = arith.constant 0 : i32
    %c0_i32_0 = arith.constant 0 : i32
    %c0_i32_1 = arith.constant 0 : i32
    return %c0_i32, %c0_i32_0 : i32, i32
  }
  func.func @transform_13(%arg0: i32) -> (i32, i32) {
    %c0_i32 = arith.constant 0 : i32
    %c0_i32_0 = arith.constant 0 : i32
    return %arg0, %c0_i32 : i32, i32
  }
}

</mosaic_0001>

<llo_original>
// kernel: policy_forward.1
$region0: #{policy_forward.1}
  #allocation0 [shape = 'u32[]', space=smem, size = 0x4, offset = 0x4, fixed_abs, tag = 'smem constant byte address 0x4 - core index']
  #allocation1 [shape = 'u32[144,128]{1,0:T(1,128)}', space=vmem, size = 0x12000, scoped, tag = 'internal scratch']
  #allocation2 [shape = 'f32[128,384]{1,0:T(8,128)}', space=vmem, size = 0x30000, scoped, tag = 'scratch operand']
  %s0 = inlined_call_operand.vmem [shape: bf16[1,128,8], index: 0, kind: input, shape index: {}]
  %s1 = inlined_call_operand.vmem [shape: s32[16,1], index: 1, kind: input, shape index: {}]
  %s2 = inlined_call_operand.vmem [shape: f32[16,128], index: 2, kind: input, shape index: {}]
  %s3 = inlined_call_operand.vmem [shape: s32[16,128], index: 3, kind: input, shape index: {}]
  %s4 = inlined_call_operand.vmem [shape: bf16[8,384], index: 4, kind: input, shape index: {}]
  %s5 = inlined_call_operand.vmem [shape: bf16[128,384], index: 5, kind: input, shape index: {}]
  %s6 = inlined_call_operand.vmem [shape: f32[1,384], index: 6, kind: input, shape index: {}]
  %s7 = inlined_call_operand.vmem [shape: f32[1,128], index: 7, kind: input, shape index: {}]
  %s8 = inlined_call_operand.vmem [shape: bf16[128,128], index: 8, kind: input, shape index: {}]
  %s9 = inlined_call_operand.vmem [shape: bf16[128,128], index: 9, kind: input, shape index: {}]
  %s10 = inlined_call_operand.vmem [shape: f32[1,128], index: 10, kind: input, shape index: {}]
  %s11 = inlined_call_operand.vmem [shape: bf16[128,128], index: 11, kind: input, shape index: {}]
  %s12 = inlined_call_operand.vmem [shape: f32[1,128], index: 12, kind: input, shape index: {}]
  %s13 = inlined_call_operand.vmem [shape: f32[16,128], index: 13, kind: output, shape index: {}]
  %s14 = sld [smem:[#allocation0]]
  $region62: #{policy_forward.1} parent=0
    _
  %s16 = ssub.s32 1, %s14
  %s17 = scalar_select 0, %s16, %s14
  // Predicated region
  $region2: #{policy_forward.1} parent=0 // pred_check
    _
  $region3: #{policy_forward.1} parent=0 // pred_check_branch
    %19 = sbr.rel (0) target = $region5
  $region4: #{policy_forward.1} parent=0 // pred_region
    _
  $region5: #{policy_forward.1} parent=0 // pred_fallthru
    _
  // Predicated region
  $region6: #{policy_forward.1} parent=0 // pred_check
    _
  $region7: #{policy_forward.1} parent=0 // pred_check_branch
    %21 = sbr.rel (0) target = $region9
  $region8: #{policy_forward.1} parent=0 // pred_region
    _
  $region9: #{policy_forward.1} parent=0 // pred_fallthru
    _
  // Predicated region
  $region10: #{policy_forward.1} parent=0 // pred_check
    _
  $region11: #{policy_forward.1} parent=0 // pred_check_branch
    %23 = sbr.rel (0) target = $region13
  $region12: #{policy_forward.1} parent=0 // pred_region
    _
  $region13: #{policy_forward.1} parent=0 // pred_fallthru
    _
  // Predicated region
  $region14: #{policy_forward.1} parent=0 // pred_check
    _
  $region15: #{policy_forward.1} parent=0 // pred_check_branch
    %25 = sbr.rel (0) target = $region17
  $region16: #{policy_forward.1} parent=0 // pred_region
    _
  $region17: #{policy_forward.1} parent=0 // pred_fallthru
    _
  // Predicated region
  $region18: #{policy_forward.1} parent=0 // pred_check
    _
  $region19: #{policy_forward.1} parent=0 // pred_check_branch
    %27 = sbr.rel (0) target = $region21
  $region20: #{policy_forward.1} parent=0 // pred_region
    _
  $region21: #{policy_forward.1} parent=0 // pred_fallthru
    _
  // Predicated region
  $region22: #{policy_forward.1} parent=0 // pred_check
    _
  $region23: #{policy_forward.1} parent=0 // pred_check_branch
    %29 = sbr.rel (0) target = $region25
  $region24: #{policy_forward.1} parent=0 // pred_region
    _
  $region25: #{policy_forward.1} parent=0 // pred_fallthru
    _
  // Predicated region
  $region26: #{policy_forward.1} parent=0 // pred_check
    _
  $region27: #{policy_forward.1} parent=0 // pred_check_branch
    %31 = sbr.rel (0) target = $region29
  $region28: #{policy_forward.1} parent=0 // pred_region
    _
  $region29: #{policy_forward.1} parent=0 // pred_fallthru
    _
  // Predicated region
  $region30: #{policy_forward.1} parent=0 // pred_check
    _
  $region31: #{policy_forward.1} parent=0 // pred_check_branch
    %33 = sbr.rel (0) target = $region33
  $region32: #{policy_forward.1} parent=0 // pred_region
    _
  $region33: #{policy_forward.1} parent=0 // pred_fallthru
    _
  // Predicated region
  $region34: #{policy_forward.1} parent=0 // pred_check
    _
  $region35: #{policy_forward.1} parent=0 // pred_check_branch
    %35 = sbr.rel (0) target = $region37
  $region36: #{policy_forward.1} parent=0 // pred_region
    _
  $region37: #{policy_forward.1} parent=0 // pred_fallthru
    _
  // Predicated region
  $region38: #{policy_forward.1} parent=0 // pred_check
    _
  $region39: #{policy_forward.1} parent=0 // pred_check_branch
    %37 = sbr.rel (0) target = $region41
  $region40: #{policy_forward.1} parent=0 // pred_region
    _
  $region41: #{policy_forward.1} parent=0 // pred_fallthru
    _
  // Predicated region
  $region42: #{policy_forward.1} parent=0 // pred_check
    _
  $region43: #{policy_forward.1} parent=0 // pred_check_branch
    %39 = sbr.rel (0) target = $region45
  $region44: #{policy_forward.1} parent=0 // pred_region
    _
  $region45: #{policy_forward.1} parent=0 // pred_fallthru
    _
  // Predicated region
  $region46: #{policy_forward.1} parent=0 // pred_check
    _
  $region47: #{policy_forward.1} parent=0 // pred_check_branch
    %41 = sbr.rel (0) target = $region49
  $region48: #{policy_forward.1} parent=0 // pred_region
    _
  $region49: #{policy_forward.1} parent=0 // pred_fallthru
    _
  // Predicated region
  $region50: #{policy_forward.1} parent=0 // pred_check
    _
  $region51: #{policy_forward.1} parent=0 // pred_check_branch
    %43 = sbr.rel (0) target = $region53
  $region52: #{policy_forward.1} parent=0 // pred_region
    _
  $region53: #{policy_forward.1} parent=0 // pred_fallthru
    _
  %v45 = vld [vmem:[%s0] sm:$0xf]
  %v46 = vld [vmem:[%s0 + $0x4] sm:$0xf]
  %v47 = vld [vmem:[%s0 + $0x8] sm:$0xf]
  %v48 = vld [vmem:[%s0 + $0xc] sm:$0xf]
  %v49 = vld [vmem:[%s0 + $0x10] sm:$0xf]
  %v50 = vld [vmem:[%s0 + $0x14] sm:$0xf]
  %v51 = vld [vmem:[%s0 + $0x18] sm:$0xf]
  %v52 = vld [vmem:[%s0 + $0x1c] sm:$0xf]
  %v53 = vld [vmem:[%s0 + $0x20] sm:$0xf]
  %v54 = vld [vmem:[%s0 + $0x24] sm:$0xf]
  %v55 = vld [vmem:[%s0 + $0x28] sm:$0xf]
  %v56 = vld [vmem:[%s0 + $0x2c] sm:$0xf]
  %v57 = vld [vmem:[%s0 + $0x30] sm:$0xf]
  %v58 = vld [vmem:[%s0 + $0x34] sm:$0xf]
  %v59 = vld [vmem:[%s0 + $0x38] sm:$0xf]
  %v60 = vld [vmem:[%s0 + $0x3c] sm:$0xf]
  %v61 = vld [vmem:[%s4] sm:$0xff]
  %v62 = vld [vmem:[%s4 + $0x8] sm:$0xf]
  %v63 = vld [vmem:[%s6] sm:$0x7]
  %v65 = vlaneseq
  %v66 = vshrl.u32 %v65, 7
  %v67 = vsub.s32 0, %v66
  %v68 = vrot.slane %v63, %v67
  %v69 = vlaneseq
  %v70 = vshrl.u32 %v69, 7
  %v71 = vsub.s32 1, %v70
  %v72 = vrot.slane %v63, %v71
  %v73 = vlaneseq
  %v74 = vshrl.u32 %v73, 7
  %v75 = vsub.s32 2, %v74
  %v76 = vrot.slane %v63, %v75
  %v96 = vunpack.c.l.b16 %v45
  %v97 = vunpack.c.l.b16 %v46
  %v98 = vunpack.c.l.b16 %v47
  %v99 = vunpack.c.l.b16 %v48
  %v100 = vunpack.c.l.b16 %v49
  %v101 = vunpack.c.l.b16 %v50
  %v102 = vunpack.c.l.b16 %v51
  %v103 = vunpack.c.l.b16 %v52
  %v104 = vunpack.c.l.b16 %v53
  %v105 = vunpack.c.l.b16 %v54
  %v106 = vunpack.c.l.b16 %v55
  %v107 = vunpack.c.l.b16 %v56
  %v108 = vunpack.c.l.b16 %v57
  %v109 = vunpack.c.l.b16 %v58
  %v110 = vunpack.c.l.b16 %v59
  %v111 = vunpack.c.l.b16 %v60
  %v112 = vpack.c.b16 %v97, %v96
  %v113 = vpack.c.b16 %v99, %v98
  %v114 = vpack.c.b16 %v101, %v100
  %v115 = vpack.c.b16 %v103, %v102
  %v116 = vpack.c.b16 %v105, %v104
  %v117 = vpack.c.b16 %v107, %v106
  %v118 = vpack.c.b16 %v109, %v108
  %v119 = vpack.c.b16 %v111, %v110
  %v122 = vunpack.c.l.b16 %v61
  %v123 = vunpack.c.h.b16 %v61
  %v124 = vunpack.c.l.b16 %v62
  %v125 = vpack.c.b16 %v122, %v122
  %v126 = vpack.c.b16 %v123, %v123
  %v127 = vpack.c.b16 %v124, %v124
  %vm128 = vcmask 64512
  %v130 = vsel %vm128, %v112, 0
  %v133 = vsel %vm128, %v113, 0
  %v136 = vsel %vm128, %v114, 0
  %v139 = vsel %vm128, %v115, 0
  %v142 = vsel %vm128, %v116, 0
  %v145 = vsel %vm128, %v117, 0
  %v148 = vsel %vm128, %v118, 0
  %v151 = vsel %vm128, %v119, 0
  %vm153 = vcmask 1043456
  %v155 = vsel %vm153, %v125, 0
  %v158 = vsel %vm153, %v126, 0
  %v161 = vsel %vm153, %v127, 0
  %163 = vmatprep.subr.bf16.mxu0 %v158
  %164 = vmatpush1.bf16.msra.mxu0 %v155
  %165 = vmatprep.subr.bf16.mxu0 0
  %166 = vmatpush1.bf16.msra.mxu0 0
  %167 = vmatprep.subr.bf16.mxu0 0
  %168 = vmatpush1.bf16.msra.mxu0 0
  %169 = vmatprep.subr.bf16.mxu0 0
  %170 = vmatpush1.bf16.msra.mxu0 0
  %171 = vmatprep.subr.bf16.mxu0 0
  %172 = vmatpush1.bf16.msra.mxu0 0
  %173 = vmatprep.subr.bf16.mxu0 0
  %174 = vmatpush1.bf16.msra.mxu0 0
  %175 = vmatprep.subr.bf16.mxu0 0
  %176 = vmatpush1.bf16.msra.mxu0 0
  %177 = vmatprep.subr.bf16.mxu0 0
  %178 = vmatpush1.bf16.msra.mxu0 0
  %179 = vmatprep.subr.bf16.mxu0 0
  %180 = vmatpush1.bf16.msra.mxu0 0
  %181 = vmatprep.subr.bf16.mxu0 0
  %182 = vmatpush1.bf16.msra.mxu0 0
  %183 = vmatprep.subr.bf16.mxu0 0
  %184 = vmatpush1.bf16.msra.mxu0 0
  %185 = vmatprep.subr.bf16.mxu0 0
  %186 = vmatpush1.bf16.msra.mxu0 0
  %187 = vmatprep.subr.bf16.mxu0 0
  %188 = vmatpush1.bf16.msra.mxu0 0
  %189 = vmatprep.subr.bf16.mxu0 0
  %190 = vmatpush1.bf16.msra.mxu0 0
  %191 = vmatprep.subr.bf16.mxu0 0
  %192 = vmatpush1.bf16.msra.mxu0 0
  %193 = vmatprep.subr.bf16.mxu0 0
  %194 = vmatpush1.bf16.msra.mxu0 0
  %195 = vmatprep.mubr.bf16.mxu0 0
  %196 = vmatmul.mubr.bf16.gmra.mrb[0].mxu0 %v130
  %v197 = vpop.f32.mrb[0].mxu0
  %v198 = vadd.f32 %v68, %v197
  %v199 = vpop.f32.mrb[0].mxu0
  %v200 = vadd.f32 %v72, %v199
  %v201 = vpop.f32.mrb[0].mxu0
  %v202 = vadd.f32 %v68, %v201
  %v203 = vpop.f32.mrb[0].mxu0
  %v204 = vadd.f32 %v72, %v203
  %205 = vmatprep.mubr.bf16.mxu0 0
  %206 = vmatmul.mubr.bf16.gmra.mrb[0].mxu0 %v133
  %v207 = vpop.f32.mrb[0].mxu0
  %v208 = vadd.f32 %v68, %v207
  %v209 = vpop.f32.mrb[0].mxu0
  %v210 = vadd.f32 %v72, %v209
  %v211 = vpop.f32.mrb[0].mxu0
  %v212 = vadd.f32 %v68, %v211
  %v213 = vpop.f32.mrb[0].mxu0
  %v214 = vadd.f32 %v72, %v213
  %215 = vmatprep.mubr.bf16.mxu0 0
  %216 = vmatmul.mubr.bf16.gmra.mrb[0].mxu0 %v136
  %v217 = vpop.f32.mrb[0].mxu0
  %v218 = vadd.f32 %v68, %v217
  %v219 = vpop.f32.mrb[0].mxu0
  %v220 = vadd.f32 %v72, %v219
  %v221 = vpop.f32.mrb[0].mxu0
  %v222 = vadd.f32 %v68, %v221
  %v223 = vpop.f32.mrb[0].mxu0
  %v224 = vadd.f32 %v72, %v223
  %225 = vmatprep.mubr.bf16.mxu0 0
  %226 = vmatmul.mubr.bf16.gmra.mrb[0].mxu0 %v139
  %v227 = vpop.f32.mrb[0].mxu0
  %v228 = vadd.f32 %v68, %v227
  %v229 = vpop.f32.mrb[0].mxu0
  %v230 = vadd.f32 %v72, %v229
  %v231 = vpop.f32.mrb[0].mxu0
  %v232 = vadd.f32 %v68, %v231
  %v233 = vpop.f32.mrb[0].mxu0
  %v234 = vadd.f32 %v72, %v233
  %235 = vmatprep.mubr.bf16.mxu0 0
  %236 = vmatmul.mubr.bf16.gmra.mrb[0].mxu0 %v142
  %v237 = vpop.f32.mrb[0].mxu0
  %v238 = vadd.f32 %v68, %v237
  %v239 = vpop.f32.mrb[0].mxu0
  %v240 = vadd.f32 %v72, %v239
  %v241 = vpop.f32.mrb[0].mxu0
  %v242 = vadd.f32 %v68, %v241
  %v243 = vpop.f32.mrb[0].mxu0
  %v244 = vadd.f32 %v72, %v243
  %245 = vmatprep.mubr.bf16.mxu0 0
  %246 = vmatmul.mubr.bf16.gmra.mrb[0].mxu0 %v145
  %v247 = vpop.f32.mrb[0].mxu0
  %v248 = vadd.f32 %v68, %v247
  %v249 = vpop.f32.mrb[0].mxu0
  %v250 = vadd.f32 %v72, %v249
  %v251 = vpop.f32.mrb[0].mxu0
  %v252 = vadd.f32 %v68, %v251
  %v253 = vpop.f32.mrb[0].mxu0
  %v254 = vadd.f32 %v72, %v253
  %255 = vmatprep.mubr.bf16.mxu0 0
  %256 = vmatmul.mubr.bf16.gmra.mrb[0].mxu0 %v148
  %v257 = vpop.f32.mrb[0].mxu0
  %v258 = vadd.f32 %v68, %v257
  %v259 = vpop.f32.mrb[0].mxu0
  %v260 = vadd.f32 %v72, %v259
  %v261 = vpop.f32.mrb[0].mxu0
  %v262 = vadd.f32 %v68, %v261
  %v263 = vpop.f32.mrb[0].mxu0
  %v264 = vadd.f32 %v72, %v263
  %265 = vmatprep.mubr.bf16.mxu0 0
  %266 = vmatmul.mubr.bf16.gmra.mrb[0].mxu0 %v151
  %v267 = vpop.f32.mrb[0].mxu0
  %v268 = vadd.f32 %v68, %v267
  %v269 = vpop.f32.mrb[0].mxu0
  %v270 = vadd.f32 %v72, %v269
  %v271 = vpop.f32.mrb[0].mxu0
  %v272 = vadd.f32 %v68, %v271
  %v273 = vpop.f32.mrb[0].mxu0
  %v274 = vadd.f32 %v72, %v273
  %275 = vdwg.mxu0
  %276 = vmatprep.subr.bf16.mxu0 0
  %277 = vmatpush1.bf16.msra.mxu0 %v161
  %278 = vmatprep.subr.bf16.mxu0 0
  %279 = vmatpush1.bf16.msra.mxu0 0
  %280 = vmatprep.subr.bf16.mxu0 0
  %281 = vmatpush1.bf16.msra.mxu0 0
  %282 = vmatprep.subr.bf16.mxu0 0
  %283 = vmatpush1.bf16.msra.mxu0 0
  %284 = vmatprep.subr.bf16.mxu0 0
  %285 = vmatpush1.bf16.msra.mxu0 0
  %286 = vmatprep.subr.bf16.mxu0 0
  %287 = vmatpush1.bf16.msra.mxu0 0
  %288 = vmatprep.subr.bf16.mxu0 0
  %289 = vmatpush1.bf16.msra.mxu0 0
  %290 = vmatprep.subr.bf16.mxu0 0
  %291 = vmatpush1.bf16.msra.mxu0 0
  %292 = vmatprep.subr.bf16.mxu0 0
  %293 = vmatpush1.bf16.msra.mxu0 0
  %294 = vmatprep.subr.bf16.mxu0 0
  %295 = vmatpush1.bf16.msra.mxu0 0
  %296 = vmatprep.subr.bf16.mxu0 0
  %297 = vmatpush1.bf16.msra.mxu0 0
  %298 = vmatprep.subr.bf16.mxu0 0
  %299 = vmatpush1.bf16.msra.mxu0 0
  %300 = vmatprep.subr.bf16.mxu0 0
  %301 = vmatpush1.bf16.msra.mxu0 0
  %302 = vmatprep.subr.bf16.mxu0 0
  %303 = vmatpush1.bf16.msra.mxu0 0
  %304 = vmatprep.subr.bf16.mxu0 0
  %305 = vmatpush1.bf16.msra.mxu0 0
  %306 = vmatprep.subr.bf16.mxu0 0
  %307 = vmatpush1.bf16.msra.mxu0 0
  %308 = vmatprep.mubr.bf16.mxu0 0
  %309 = vmatmul.mubr.bf16.gmra.mrb[0].mxu0 %v130
  %v310 = vpop.f32.mrb[0].mxu0
  %v311 = vadd.f32 %v76, %v310
  %v312 = vpop.f32.mrb[0].mxu0
  %v313 = vpop.f32.mrb[0].mxu0
  %v314 = vadd.f32 %v76, %v313
  %v315 = vpop.f32.mrb[0].mxu0
  %316 = vmatprep.mubr.bf16.mxu0 0
  %317 = vmatmul.mubr.bf16.gmra.mrb[0].mxu0 %v133
  %v318 = vpop.f32.mrb[0].mxu0
  %v319 = vadd.f32 %v76, %v318
  %v320 = vpop.f32.mrb[0].mxu0
  %v321 = vpop.f32.mrb[0].mxu0
  %v322 = vadd.f32 %v76, %v321
  %v323 = vpop.f32.mrb[0].mxu0
  %324 = vmatprep.mubr.bf16.mxu0 0
  %325 = vmatmul.mubr.bf16.gmra.mrb[0].mxu0 %v136
  %v326 = vpop.f32.mrb[0].mxu0
  %v327 = vadd.f32 %v76, %v326
  %v328 = vpop.f32.mrb[0].mxu0
  %v329 = vpop.f32.mrb[0].mxu0
  %v330 = vadd.f32 %v76, %v329
  %v331 = vpop.f32.mrb[0].mxu0
  %332 = vmatprep.mubr.bf16.mxu0 0
  %333 = vmatmul.mubr.bf16.gmra.mrb[0].mxu0 %v139
  %v334 = vpop.f32.mrb[0].mxu0
  %v335 = vadd.f32 %v76, %v334
  %v336 = vpop.f32.mrb[0].mxu0
  %v337 = vpop.f32.mrb[0].mxu0
  %v338 = vadd.f32 %v76, %v337
  %v339 = vpop.f32.mrb[0].mxu0
  %340 = vmatprep.mubr.bf16.mxu0 0
  %341 = vmatmul.mubr.bf16.gmra.mrb[0].mxu0 %v142
  %v342 = vpop.f32.mrb[0].mxu0
  %v343 = vadd.f32 %v76, %v342
  %v344 = vpop.f32.mrb[0].mxu0
  %v345 = vpop.f32.mrb[0].mxu0
  %v346 = vadd.f32 %v76, %v345
  %v347 = vpop.f32.mrb[0].mxu0
  %348 = vmatprep.mubr.bf16.mxu0 0
  %349 = vmatmul.mubr.bf16.gmra.mrb[0].mxu0 %v145
  %v350 = vpop.f32.mrb[0].mxu0
  %v351 = vadd.f32 %v76, %v350
  %v352 = vpop.f32.mrb[0].mxu0
  %v353 = vpop.f32.mrb[0].mxu0
  %v354 = vadd.f32 %v76, %v353
  %v355 = vpop.f32.mrb[0].mxu0
  %356 = vmatprep.mubr.bf16.mxu0 0
  %357 = vmatmul.mubr.bf16.gmra.mrb[0].mxu0 %v148
  %v358 = vpop.f32.mrb[0].mxu0
  %v359 = vadd.f32 %v76, %v358
  %v360 = vpop.f32.mrb[0].mxu0
  %v361 = vpop.f32.mrb[0].mxu0
  %v362 = vadd.f32 %v76, %v361
  %v363 = vpop.f32.mrb[0].mxu0
  %364 = vmatprep.mubr.bf16.mxu0 0
  %365 = vmatmul.mubr.bf16.gmra.mrb[0].mxu0 %v151
  %v366 = vpop.f32.mrb[0].mxu0
  %v367 = vadd.f32 %v76, %v366
  %v368 = vpop.f32.mrb[0].mxu0
  %v369 = vpop.f32.mrb[0].mxu0
  %v370 = vadd.f32 %v76, %v369
  %v371 = vpop.f32.mrb[0].mxu0
  %372 = vdwg.mxu0
  %373 = vst [vmem:[#allocation2] sm:$0xff] %v198
  %374 = vst [vmem:[#allocation2 + $0x8] sm:$0xff] %v200
  %375 = vst [vmem:[#allocation2 + $0x10] sm:$0xff] %v311
  %376 = vst [vmem:[#allocation2 + $0x18] sm:$0xff] %v202
  %377 = vst [vmem:[#allocation2 + $0x20] sm:$0xff] %v204
  %378 = vst [vmem:[#allocation2 + $0x28] sm:$0xff] %v314
  %379 = vst [vmem:[#allocation2 + $0x30] sm:$0xff] %v208
  %380 = vst [vmem:[#allocation2 + $0x38] sm:$0xff] %v210
  %381 = vst [vmem:[#allocation2 + $0x40] sm:$0xff] %v319
  %382 = vst [vmem:[#allocation2 + $0x48] sm:$0xff] %v212
  %383 = vst [vmem:[#allocation2 + $0x50] sm:$0xff] %v214
  %384 = vst [vmem:[#allocation2 + $0x58] sm:$0xff] %v322
  %385 = vst [vmem:[#allocation2 + $0x60] sm:$0xff] %v218
  %386 = vst [vmem:[#allocation2 + $0x68] sm:$0xff] %v220
  %387 = vst [vmem:[#allocation2 + $0x70] sm:$0xff] %v327
  %388 = vst [vmem:[#allocation2 + $0x78] sm:$0xff] %v222
  %389 = vst [vmem:[#allocation2 + $0x80] sm:$0xff] %v224
  %390 = vst [vmem:[#allocation2 + $0x88] sm:$0xff] %v330
  %391 = vst [vmem:[#allocation2 + $0x90] sm:$0xff] %v228
  %392 = vst [vmem:[#allocation2 + $0x98] sm:$0xff] %v230
  %393 = vst [vmem:[#allocation2 + $0xa0] sm:$0xff] %v335
  %394 = vst [vmem:[#allocation2 + $0xa8] sm:$0xff] %v232
  %395 = vst [vmem:[#allocation2 + $0xb0] sm:$0xff] %v234
  %396 = vst [vmem:[#allocation2 + $0xb8] sm:$0xff] %v338
  %397 = vst [vmem:[#allocation2 + $0xc0] sm:$0xff] %v238
  %398 = vst [vmem:[#allocation2 + $0xc8] sm:$0xff] %v240
  %399 = vst [vmem:[#allocation2 + $0xd0] sm:$0xff] %v343
  %400 = vst [vmem:[#allocation2 + $0xd8] sm:$0xff] %v242
  %401 = vst [vmem:[#allocation2 + $0xe0] sm:$0xff] %v244
  %402 = vst [vmem:[#allocation2 + $0xe8] sm:$0xff] %v346
  %403 = vst [vmem:[#allocation2 + $0xf0] sm:$0xff] %v248
  %404 = vst [vmem:[#allocation2 + $0xf8] sm:$0xff] %v250
  %405 = vst [vmem:[#allocation2 + $0x100] sm:$0xff] %v351
  %406 = vst [vmem:[#allocation2 + $0x108] sm:$0xff] %v252
  %407 = vst [vmem:[#allocation2 + $0x110] sm:$0xff] %v254
  %408 = vst [vmem:[#allocation2 + $0x118] sm:$0xff] %v354
  %409 = vst [vmem:[#allocation2 + $0x120] sm:$0xff] %v258
  %410 = vst [vmem:[#allocation2 + $0x128] sm:$0xff] %v260
  %411 = vst [vmem:[#allocation2 + $0x130] sm:$0xff] %v359
  %412 = vst [vmem:[#allocation2 + $0x138] sm:$0xff] %v262
  %413 = vst [vmem:[#allocation2 + $0x140] sm:$0xff] %v264
  %414 = vst [vmem:[#allocation2 + $0x148] sm:$0xff] %v362
  %415 = vst [vmem:[#allocation2 + $0x150] sm:$0xff] %v268
  %416 = vst [vmem:[#allocation2 + $0x158] sm:$0xff] %v270
  %417 = vst [vmem:[#allocation2 + $0x160] sm:$0xff] %v367
  %418 = vst [vmem:[#allocation2 + $0x168] sm:$0xff] %v272
  %419 = vst [vmem:[#allocation2 + $0x170] sm:$0xff] %v274
  %420 = vst [vmem:[#allocation2 + $0x178] sm:$0xff] %v370
  %v421 = vld [vmem:[%s5] sm:$0xff]
  %v422 = vld [vmem:[%s5 + $0x8] sm:$0xf]
  %v423 = vld [vmem:[%s5 + $0xc] sm:$0xff]
  %v424 = vld [vmem:[%s5 + $0x14] sm:$0xf]
  %v425 = vld [vmem:[%s5 + $0x18] sm:$0xff]
  %v426 = vld [vmem:[%s5 + $0x20] sm:$0xf]
  %v427 = vld [vmem:[%s5 + $0x24] sm:$0xff]
  %v428 = vld [vmem:[%s5 + $0x2c] sm:$0xf]
  %v429 = vld [vmem:[%s5 + $0x30] sm:$0xff]
  %v430 = vld [vmem:[%s5 + $0x38] sm:$0xf]
  %v431 = vld [vmem:[%s5 + $0x3c] sm:$0xff]
  %v432 = vld [vmem:[%s5 + $0x44] sm:$0xf]
  %v433 = vld [vmem:[%s5 + $0x48] sm:$0xff]
  %v434 = vld [vmem:[%s5 + $0x50] sm:$0xf]
  %v435 = vld [vmem:[%s5 + $0x54] sm:$0xff]
  %v436 = vld [vmem:[%s5 + $0x5c] sm:$0xf]
  %v437 = vld [vmem:[%s5 + $0x60] sm:$0xff]
  %v438 = vld [vmem:[%s5 + $0x68] sm:$0xf]
  %v439 = vld [vmem:[%s5 + $0x6c] sm:$0xff]
  %v440 = vld [vmem:[%s5 + $0x74] sm:$0xf]
  %v441 = vld [vmem:[%s5 + $0x78] sm:$0xff]
  %v442 = vld [vmem:[%s5 + $0x80] sm:$0xf]
  %v443 = vld [vmem:[%s5 + $0x84] sm:$0xff]
  %v444 = vld [vmem:[%s5 + $0x8c] sm:$0xf]
  %v445 = vld [vmem:[%s5 + $0x90] sm:$0xff]
  %v446 = vld [vmem:[%s5 + $0x98] sm:$0xf]
  %v447 = vld [vmem:[%s5 + $0x9c] sm:$0xff]
  %v448 = vld [vmem:[%s5 + $0xa4] sm:$0xf]
  %v449 = vld [vmem:[%s5 + $0xa8] sm:$0xff]
  %v450 = vld [vmem:[%s5 + $0xb0] sm:$0xf]
  %v451 = vld [vmem:[%s5 + $0xb4] sm:$0xff]
  %v452 = vld [vmem:[%s5 + $0xbc] sm:$0xf]
  %v453 = vld [vmem:[%s7] sm:$0x1]
  %v454 = vld [vmem:[%s1] sm:$0xff]
  %v455 = vld [vmem:[%s1 + $0x8] sm:$0xff]
  %s456 = smul.u32 0, 3
  %s457 = smul.addr %s456, 8
  %s458 = scalar_lea.vmem [#allocation2], %s457
  %v459 = vld [vmem:[%s458] sm:$0xff]
  %v460 = vld [vmem:[%s458 + $0x8] sm:$0xff]
  %v461 = vld [vmem:[%s458 + $0x10] sm:$0xff]
  %v462 = vld [vmem:[%s458 + $0x18] sm:$0xff]
  %v463 = vld [vmem:[%s458 + $0x20] sm:$0xff]
  %v464 = vld [vmem:[%s458 + $0x28] sm:$0xff]
  %v497 = vunpack.c.l.b16 %v421
  %v498 = vunpack.c.h.b16 %v421
  %v499 = vunpack.c.l.b16 %v422
  %v500 = vunpack.c.l.b16 %v423
  %v501 = vunpack.c.h.b16 %v423
  %v502 = vunpack.c.l.b16 %v424
  %v503 = vunpack.c.l.b16 %v425
  %v504 = vunpack.c.h.b16 %v425
  %v505 = vunpack.c.l.b16 %v426
  %v506 = vunpack.c.l.b16 %v427
  %v507 = vunpack.c.h.b16 %v427
  %v508 = vunpack.c.l.b16 %v428
  %v509 = vunpack.c.l.b16 %v429
  %v510 = vunpack.c.h.b16 %v429
  %v511 = vunpack.c.l.b16 %v430
  %v512 = vunpack.c.l.b16 %v431
  %v513 = vunpack.c.h.b16 %v431
  %v514 = vunpack.c.l.b16 %v432
  %v515 = vunpack.c.l.b16 %v433
  %v516 = vunpack.c.h.b16 %v433
  %v517 = vunpack.c.l.b16 %v434
  %v518 = vunpack.c.l.b16 %v435
  %v519 = vunpack.c.h.b16 %v435
  %v520 = vunpack.c.l.b16 %v436
  %v521 = vunpack.c.l.b16 %v437
  %v522 = vunpack.c.h.b16 %v437
  %v523 = vunpack.c.l.b16 %v438
  %v524 = vunpack.c.l.b16 %v439
  %v525 = vunpack.c.h.b16 %v439
  %v526 = vunpack.c.l.b16 %v440
  %v527 = vunpack.c.l.b16 %v441
  %v528 = vunpack.c.h.b16 %v441
  %v529 = vunpack.c.l.b16 %v442
  %v530 = vunpack.c.l.b16 %v443
  %v531 = vunpack.c.h.b16 %v443
  %v532 = vunpack.c.l.b16 %v444
  %v533 = vunpack.c.l.b16 %v445
  %v534 = vunpack.c.h.b16 %v445
  %v535 = vunpack.c.l.b16 %v446
  %v536 = vunpack.c.l.b16 %v447
  %v537 = vunpack.c.h.b16 %v447
  %v538 = vunpack.c.l.b16 %v448
  %v539 = vunpack.c.l.b16 %v449
  %v540 = vunpack.c.h.b16 %v449
  %v541 = vunpack.c.l.b16 %v450
  %v542 = vunpack.c.l.b16 %v451
  %v543 = vunpack.c.h.b16 %v451
  %v544 = vunpack.c.l.b16 %v452
  %v545 = vpack.c.b16 %v500, %v497
  %v546 = vpack.c.b16 %v501, %v498
  %v547 = vpack.c.b16 %v502, %v499
  %v548 = vpack.c.b16 %v506, %v503
  %v549 = vpack.c.b16 %v507, %v504
  %v550 = vpack.c.b16 %v508, %v505
  %v551 = vpack.c.b16 %v512, %v509
  %v552 = vpack.c.b16 %v513, %v510
  %v553 = vpack.c.b16 %v514, %v511
  %v554 = vpack.c.b16 %v518, %v515
  %v555 = vpack.c.b16 %v519, %v516
  %v556 = vpack.c.b16 %v520, %v517
  %v557 = vpack.c.b16 %v524, %v521
  %v558 = vpack.c.b16 %v525, %v522
  %v559 = vpack.c.b16 %v526, %v523
  %v560 = vpack.c.b16 %v530, %v527
  %v561 = vpack.c.b16 %v531, %v528
  %v562 = vpack.c.b16 %v532, %v529
  %v563 = vpack.c.b16 %v536, %v533
  %v564 = vpack.c.b16 %v537, %v534
  %v565 = vpack.c.b16 %v538, %v535
  %v566 = vpack.c.b16 %v542, %v539
  %v567 = vpack.c.b16 %v543, %v540
  %v568 = vpack.c.b16 %v544, %v541
  %593 = vmatprep.subr.bf16.mxu0 %v546
  %594 = vmatpush1.bf16.msra.mxu0 %v545
  %595 = vmatprep.subr.bf16.mxu0 %v549
  %596 = vmatpush1.bf16.msra.mxu0 %v548
  %597 = vmatprep.subr.bf16.mxu0 %v552
  %598 = vmatpush1.bf16.msra.mxu0 %v551
  %599 = vmatprep.subr.bf16.mxu0 %v555
  %600 = vmatpush1.bf16.msra.mxu0 %v554
  %601 = vmatprep.subr.bf16.mxu0 %v558
  %602 = vmatpush1.bf16.msra.mxu0 %v557
  %603 = vmatprep.subr.bf16.mxu0 %v561
  %604 = vmatpush1.bf16.msra.mxu0 %v560
  %605 = vmatprep.subr.bf16.mxu0 %v564
  %606 = vmatpush1.bf16.msra.mxu0 %v563
  %607 = vmatprep.subr.bf16.mxu0 %v567
  %608 = vmatpush1.bf16.msra.mxu0 %v566
  %609 = vmatprep.subr.bf16.mxu0 0
  %610 = vmatpush1.bf16.msra.mxu0 0
  %611 = vmatprep.subr.bf16.mxu0 0
  %612 = vmatpush1.bf16.msra.mxu0 0
  %613 = vmatprep.subr.bf16.mxu0 0
  %614 = vmatpush1.bf16.msra.mxu0 0
  %615 = vmatprep.subr.bf16.mxu0 0
  %616 = vmatpush1.bf16.msra.mxu0 0
  %617 = vmatprep.subr.bf16.mxu0 0
  %618 = vmatpush1.bf16.msra.mxu0 0
  %619 = vmatprep.subr.bf16.mxu0 0
  %620 = vmatpush1.bf16.msra.mxu0 0
  %621 = vmatprep.subr.bf16.mxu0 0
  %622 = vmatpush1.bf16.msra.mxu0 0
  %623 = vmatprep.subr.bf16.mxu0 0
  %624 = vmatpush1.bf16.msra.mxu0 0
  %625 = vmatprep.mubr.bf16.mxu0 0
  %626 = vmatmul.mubr.bf16.gmra.mrb[0].mxu0 0
  %v627 = vpop.f32.mrb[0].mxu0
  %v628 = vadd.f32 0.0, %v627
  %v629 = vpop.f32.mrb[0].mxu0
  %v630 = vadd.f32 0.0, %v629
  %v631 = vpop.f32.mrb[0].mxu0
  %v632 = vadd.f32 0.0, %v631
  %v633 = vpop.f32.mrb[0].mxu0
  %v634 = vadd.f32 0.0, %v633
  %635 = vdwg.mxu0
  %636 = vmatprep.subr.bf16.mxu0 0
  %637 = vmatpush1.bf16.msra.mxu0 %v547
  %638 = vmatprep.subr.bf16.mxu0 0
  %639 = vmatpush1.bf16.msra.mxu0 %v550
  %640 = vmatprep.subr.bf16.mxu0 0
  %641 = vmatpush1.bf16.msra.mxu0 %v553
  %642 = vmatprep.subr.bf16.mxu0 0
  %643 = vmatpush1.bf16.msra.mxu0 %v556
  %644 = vmatprep.subr.bf16.mxu0 0
  %645 = vmatpush1.bf16.msra.mxu0 %v559
  %646 = vmatprep.subr.bf16.mxu0 0
  %647 = vmatpush1.bf16.msra.mxu0 %v562
  %648 = vmatprep.subr.bf16.mxu0 0
  %649 = vmatpush1.bf16.msra.mxu0 %v565
  %650 = vmatprep.subr.bf16.mxu0 0
  %651 = vmatpush1.bf16.msra.mxu0 %v568
  %652 = vmatprep.subr.bf16.mxu0 0
  %653 = vmatpush1.bf16.msra.mxu0 0
  %654 = vmatprep.subr.bf16.mxu0 0
  %655 = vmatpush1.bf16.msra.mxu0 0
  %656 = vmatprep.subr.bf16.mxu0 0
  %657 = vmatpush1.bf16.msra.mxu0 0
  %658 = vmatprep.subr.bf16.mxu0 0
  %659 = vmatpush1.bf16.msra.mxu0 0
  %660 = vmatprep.subr.bf16.mxu0 0
  %661 = vmatpush1.bf16.msra.mxu0 0
  %662 = vmatprep.subr.bf16.mxu0 0
  %663 = vmatpush1.bf16.msra.mxu0 0
  %664 = vmatprep.subr.bf16.mxu0 0
  %665 = vmatpush1.bf16.msra.mxu0 0
  %666 = vmatprep.subr.bf16.mxu0 0
  %667 = vmatpush1.bf16.msra.mxu0 0
  %668 = vmatprep.mubr.bf16.mxu0 0
  %669 = vmatmul.mubr.bf16.gmra.mrb[0].mxu0 0
  %v670 = vpop.f32.mrb[0].mxu0
  %v671 = vadd.f32 0.0, %v670
  %v672 = vpop.f32.mrb[0].mxu0
  %v673 = vpop.f32.mrb[0].mxu0
  %v674 = vadd.f32 0.0, %v673
  %v675 = vpop.f32.mrb[0].mxu0
  %676 = vdwg.mxu0
  %v677 = vadd.f32 %v459, %v628
  %v678 = vadd.f32 %v462, %v632
  %v679 = vxor.u32 %v677, 2147483648
  %v680 = vxor.u32 %v678, 2147483648
  %v681 = vmul.f32 %v679, 1.442695
  %v682 = vpow.pop %v681
  %v683 = vmul.f32 %v680, 1.442695
  %v684 = vpow.pop %v683
  %v685 = vadd.f32 %v682, 1.0
  %v686 = vadd.f32 %v684, 1.0
  %v687 = vrcp.pop %v685
  %v688 = vmul.f32 1.0, %v687
  %v689 = vrcp.pop %v686
  %v690 = vmul.f32 1.0, %v689
  %v691 = vadd.f32 %v460, %v630
  %v692 = vadd.f32 %v463, %v634
  %v693 = vxor.u32 %v691, 2147483648
  %v694 = vxor.u32 %v692, 2147483648
  %v695 = vmul.f32 %v693, 1.442695
  %v696 = vpow.pop %v695
  %v697 = vmul.f32 %v694, 1.442695
  %v698 = vpow.pop %v697
  %v699 = vadd.f32 %v696, 1.0
  %v700 = vadd.f32 %v698, 1.0
  %v701 = vrcp.pop %v699
  %v702 = vmul.f32 1.0, %v701
  %v703 = vrcp.pop %v700
  %v704 = vmul.f32 1.0, %v703
  %v706 = vlaneseq
  %v707 = vshrl.u32 %v706, 7
  %v708 = vsub.s32 0, %v707
  %v709 = vrot.slane %v453, %v708
  %v711 = vadd.f32 %v671, %v709
  %v712 = vadd.f32 %v674, %v709
  %v713 = vmul.f32 %v688, %v711
  %v714 = vmul.f32 %v690, %v712
  %v715 = vadd.f32 %v461, %v713
  %v716 = vadd.f32 %v464, %v714
  %v717 = vtanh.pop %v715
  %v718 = vtanh.pop %v716
  %v719 = vsub.f32 1.0, %v702
  %v720 = vsub.f32 1.0, %v704
  %v721 = vmul.f32 %v719, %v717
  %v722 = vmul.f32 %v720, %v718
  %v723 = vmul.f32 %v702, 0.0
  %v724 = vmul.f32 %v704, 0.0
  %v725 = vadd.f32 %v721, %v723
  %v726 = vadd.f32 %v722, %v724
  %vm727 = vcmp.gt.s32.totalorder %v454, 0
  %vm728 = vcmp.gt.s32.totalorder %v455, 0
  %v729 = vsel %vm727, 1, 0
  %v730 = vsel %vm728, 1, 0
  %731 = vset.pattern.permute.xlu0 0
  %732 = vperm.xlu0 %731, %v729
  %v733 = vpop.permute.xlu0 %732
  %734 = vset.pattern.permute.xlu0 0
  %735 = vperm.xlu0 %734, %v730
  %v736 = vpop.permute.xlu0 %735
  %vm737 = vcmp.eq.s32.totalorder %v733, 1
  %vm738 = vcmp.eq.s32.totalorder %v736, 1
  %v739 = vsel %vm737, %v725, 0.0
  %v740 = vsel %vm738, %v726, 0.0
  %s741 = smul.u32 2, 3
  %s742 = smul.addr %s741, 8
  %s743 = scalar_lea.vmem [#allocation2], %s742
  %v744 = vld [vmem:[%s743] sm:$0xff]
  %v745 = vld [vmem:[%s743 + $0x8] sm:$0xff]
  %v746 = vld [vmem:[%s743 + $0x10] sm:$0xff]
  %v747 = vld [vmem:[%s743 + $0x18] sm:$0xff]
  %v748 = vld [vmem:[%s743 + $0x20] sm:$0xff]
  %v749 = vld [vmem:[%s743 + $0x28] sm:$0xff]
  %v750 = vpack.c.bf16 %v740, %v739
  %751 = vmatprep.subr.bf16.mxu0 %v546
  %752 = vmatpush1.bf16.msra.mxu0 %v545
  %753 = vmatprep.subr.bf16.mxu0 %v549
  %754 = vmatpush1.bf16.msra.mxu0 %v548
  %755 = vmatprep.subr.bf16.mxu0 %v552
  %756 = vmatpush1.bf16.msra.mxu0 %v551
  %757 = vmatprep.subr.bf16.mxu0 %v555
  %758 = vmatpush1.bf16.msra.mxu0 %v554
  %759 = vmatprep.subr.bf16.mxu0 %v558
  %760 = vmatpush1.bf16.msra.mxu0 %v557
  %761 = vmatprep.subr.bf16.mxu0 %v561
  %762 = vmatpush1.bf16.msra.mxu0 %v560
  %763 = vmatprep.subr.bf16.mxu0 %v564
  %764 = vmatpush1.bf16.msra.mxu0 %v563
  %765 = vmatprep.subr.bf16.mxu0 %v567
  %766 = vmatpush1.bf16.msra.mxu0 %v566
  %767 = vmatprep.subr.bf16.mxu0 0
  %768 = vmatpush1.bf16.msra.mxu0 0
  %769 = vmatprep.subr.bf16.mxu0 0
  %770 = vmatpush1.bf16.msra.mxu0 0
  %771 = vmatprep.subr.bf16.mxu0 0
  %772 = vmatpush1.bf16.msra.mxu0 0
  %773 = vmatprep.subr.bf16.mxu0 0
  %774 = vmatpush1.bf16.msra.mxu0 0
  %775 = vmatprep.subr.bf16.mxu0 0
  %776 = vmatpush1.bf16.msra.mxu0 0
  %777 = vmatprep.subr.bf16.mxu0 0
  %778 = vmatpush1.bf16.msra.mxu0 0
  %779 = vmatprep.subr.bf16.mxu0 0
  %780 = vmatpush1.bf16.msra.mxu0 0
  %781 = vmatprep.subr.bf16.mxu0 0
  %782 = vmatpush1.bf16.msra.mxu0 0
  %783 = vmatprep.mubr.bf16.mxu0 0
  %784 = vmatmul.mubr.bf16.gmra.mrb[0].mxu0 %v750
  %v785 = vpop.f32.mrb[0].mxu0
  %v786 = vadd.f32 0.0, %v785
  %v787 = vpop.f32.mrb[0].mxu0
  %v788 = vadd.f32 0.0, %v787
  %v789 = vpop.f32.mrb[0].mxu0
  %v790 = vadd.f32 0.0, %v789
  %v791 = vpop.f32.mrb[0].mxu0
  %v792 = vadd.f32 0.0, %v791
  %793 = vdwg.mxu0
  %794 = vmatprep.subr.bf16.mxu0 0
  %795 = vmatpush1.bf16.msra.mxu0 %v547
  %796 = vmatprep.subr.bf16.mxu0 0
  %797 = vmatpush1.bf16.msra.mxu0 %v550
  %798 = vmatprep.subr.bf16.mxu0 0
  %799 = vmatpush1.bf16.msra.mxu0 %v553
  %800 = vmatprep.subr.bf16.mxu0 0
  %801 = vmatpush1.bf16.msra.mxu0 %v556
  %802 = vmatprep.subr.bf16.mxu0 0
  %803 = vmatpush1.bf16.msra.mxu0 %v559
  %804 = vmatprep.subr.bf16.mxu0 0
  %805 = vmatpush1.bf16.msra.mxu0 %v562
  %806 = vmatprep.subr.bf16.mxu0 0
  %807 = vmatpush1.bf16.msra.mxu0 %v565
  %808 = vmatprep.subr.bf16.mxu0 0
  %809 = vmatpush1.bf16.msra.mxu0 %v568
  %810 = vmatprep.subr.bf16.mxu0 0
  %811 = vmatpush1.bf16.msra.mxu0 0
  %812 = vmatprep.subr.bf16.mxu0 0
  %813 = vmatpush1.bf16.msra.mxu0 0
  %814 = vmatprep.subr.bf16.mxu0 0
  %815 = vmatpush1.bf16.msra.mxu0 0
  %816 = vmatprep.subr.bf16.mxu0 0
  %817 = vmatpush1.bf16.msra.mxu0 0
  %818 = vmatprep.subr.bf16.mxu0 0
  %819 = vmatpush1.bf16.msra.mxu0 0
  %820 = vmatprep.subr.bf16.mxu0 0
  %821 = vmatpush1.bf16.msra.mxu0 0
  %822 = vmatprep.subr.bf16.mxu0 0
  %823 = vmatpush1.bf16.msra.mxu0 0
  %824 = vmatprep.subr.bf16.mxu0 0
  %825 = vmatpush1.bf16.msra.mxu0 0
  %826 = vmatprep.mubr.bf16.mxu0 0
  %827 = vmatmul.mubr.bf16.gmra.mrb[0].mxu0 %v750
  %v828 = vpop.f32.mrb[0].mxu0
  %v829 = vadd.f32 0.0, %v828
  %v830 = vpop.f32.mrb[0].mxu0
  %v831 = vpop.f32.mrb[0].mxu0
  %v832 = vadd.f32 0.0, %v831
  %v833 = vpop.f32.mrb[0].mxu0
  %834 = vdwg.mxu0
  %v835 = vadd.f32 %v744, %v786
  %v836 = vadd.f32 %v747, %v790
  %v837 = vxor.u32 %v835, 2147483648
  %v838 = vxor.u32 %v836, 2147483648
  %v839 = vmul.f32 %v837, 1.442695
  %v840 = vpow.pop %v839
  %v841 = vmul.f32 %v838, 1.442695
  %v842 = vpow.pop %v841
  %v843 = vadd.f32 %v840, 1.0
  %v844 = vadd.f32 %v842, 1.0
  %v845 = vrcp.pop %v843
  %v846 = vmul.f32 1.0, %v845
  %v847 = vrcp.pop %v844
  %v848 = vmul.f32 1.0, %v847
  %v849 = vadd.f32 %v745, %v788
  %v850 = vadd.f32 %v748, %v792
  %v851 = vxor.u32 %v849, 2147483648
  %v852 = vxor.u32 %v850, 2147483648
  %v853 = vmul.f32 %v851, 1.442695
  %v854 = vpow.pop %v853
  %v855 = vmul.f32 %v852, 1.442695
  %v856 = vpow.pop %v855
  %v857 = vadd.f32 %v854, 1.0
  %v858 = vadd.f32 %v856, 1.0
  %v859 = vrcp.pop %v857
  %v860 = vmul.f32 1.0, %v859
  %v861 = vrcp.pop %v858
  %v862 = vmul.f32 1.0, %v861
  %v863 = vadd.f32 %v829, %v709
  %v864 = vadd.f32 %v832, %v709
  %v865 = vmul.f32 %v846, %v863
  %v866 = vmul.f32 %v848, %v864
  %v867 = vadd.f32 %v746, %v865
  %v868 = vadd.f32 %v749, %v866
  %v869 = vtanh.pop %v867
  %v870 = vtanh.pop %v868
  %v871 = vsub.f32 1.0, %v860
  %v872 = vsub.f32 1.0, %v862
  %v873 = vmul.f32 %v871, %v869
  %v874 = vmul.f32 %v872, %v870
  %v875 = vmul.f32 %v860, %v739
  %v876 = vmul.f32 %v862, %v740
  %v877 = vadd.f32 %v873, %v875
  %v878 = vadd.f32 %v874, %v876
  %vm879 = vcmp.gt.s32.totalorder %v454, 1
  %vm880 = vcmp.gt.s32.totalorder %v455, 1
  %v881 = vsel %vm879, 1, 0
  %v882 = vsel %vm880, 1, 0
  %883 = vset.pattern.permute.xlu0 0
  %884 = vperm.xlu0 %883, %v881
  %v885 = vpop.permute.xlu0 %884
  %886 = vset.pattern.permute.xlu0 0
  %887 = vperm.xlu0 %886, %v882
  %v888 = vpop.permute.xlu0 %887
  %vm889 = vcmp.eq.s32.totalorder %v885, 1
  %vm890 = vcmp.eq.s32.totalorder %v888, 1
  %v891 = vsel %vm889, %v877, %v739
  %v892 = vsel %vm890, %v878, %v740
  %s893 = smul.u32 4, 3
  %s894 = smul.addr %s893, 8
  %s895 = scalar_lea.vmem [#allocation2], %s894
  %v896 = vld [vmem:[%s895] sm:$0xff]
  %v897 = vld [vmem:[%s895 + $0x8] sm:$0xff]
  %v898 = vld [vmem:[%s895 + $0x10] sm:$0xff]
  %v899 = vld [vmem:[%s895 + $0x18] sm:$0xff]
  %v900 = vld [vmem:[%s895 + $0x20] sm:$0xff]
  %v901 = vld [vmem:[%s895 + $0x28] sm:$0xff]
  %v902 = vpack.c.bf16 %v892, %v891
  %903 = vmatprep.subr.bf16.mxu0 %v546
  %904 = vmatpush1.bf16.msra.mxu0 %v545
  %905 = vmatprep.subr.bf16.mxu0 %v549
  %906 = vmatpush1.bf16.msra.mxu0 %v548
  %907 = vmatprep.subr.bf16.mxu0 %v552
  %908 = vmatpush1.bf16.msra.mxu0 %v551
  %909 = vmatprep.subr.bf16.mxu0 %v555
  %910 = vmatpush1.bf16.msra.mxu0 %v554
  %911 = vmatprep.subr.bf16.mxu0 %v558
  %912 = vmatpush1.bf16.msra.mxu0 %v557
  %913 = vmatprep.subr.bf16.mxu0 %v561
  %914 = vmatpush1.bf16.msra.mxu0 %v560
  %915 = vmatprep.subr.bf16.mxu0 %v564
  %916 = vmatpush1.bf16.msra.mxu0 %v563
  %917 = vmatprep.subr.bf16.mxu0 %v567
  %918 = vmatpush1.bf16.msra.mxu0 %v566
  %919 = vmatprep.subr.bf16.mxu0 0
  %920 = vmatpush1.bf16.msra.mxu0 0
  %921 = vmatprep.subr.bf16.mxu0 0
  %922 = vmatpush1.bf16.msra.mxu0 0
  %923 = vmatprep.subr.bf16.mxu0 0
  %924 = vmatpush1.bf16.msra.mxu0 0
  %925 = vmatprep.subr.bf16.mxu0 0
  %926 = vmatpush1.bf16.msra.mxu0 0
  %927 = vmatprep.subr.bf16.mxu0 0
  %928 = vmatpush1.bf16.msra.mxu0 0
  %929 = vmatprep.subr.bf16.mxu0 0
  %930 = vmatpush1.bf16.msra.mxu0 0
  %931 = vmatprep.subr.bf16.mxu0 0
  %932 = vmatpush1.bf16.msra.mxu0 0
  %933 = vmatprep.subr.bf16.mxu0 0
  %934 = vmatpush1.bf16.msra.mxu0 0
  %935 = vmatprep.mubr.bf16.mxu0 0
  %936 = vmatmul.mubr.bf16.gmra.mrb[0].mxu0 %v902
  %v937 = vpop.f32.mrb[0].mxu0
  %v938 = vadd.f32 0.0, %v937
  %v939 = vpop.f32.mrb[0].mxu0
  %v940 = vadd.f32 0.0, %v939
  %v941 = vpop.f32.mrb[0].mxu0
  %v942 = vadd.f32 0.0, %v941
  %v943 = vpop.f32.mrb[0].mxu0
  %v944 = vadd.f32 0.0, %v943
  %945 = vdwg.mxu0
  %946 = vmatprep.subr.bf16.mxu0 0
  %947 = vmatpush1.bf16.msra.mxu0 %v547
  %948 = vmatprep.subr.bf16.mxu0 0
  %949 = vmatpush1.bf16.msra.mxu0 %v550
  %950 = vmatprep.subr.bf16.mxu0 0
  %951 = vmatpush1.bf16.msra.mxu0 %v553
  %952 = vmatprep.subr.bf16.mxu0 0
  %953 = vmatpush1.bf16.msra.mxu0 %v556
  %954 = vmatprep.subr.bf16.mxu0 0
  %955 = vmatpush1.bf16.msra.mxu0 %v559
  %956 = vmatprep.subr.bf16.mxu0 0
  %957 = vmatpush1.bf16.msra.mxu0 %v562
  %958 = vmatprep.subr.bf16.mxu0 0
  %959 = vmatpush1.bf16.msra.mxu0 %v565
  %960 = vmatprep.subr.bf16.mxu0 0
  %961 = vmatpush1.bf16.msra.mxu0 %v568
  %962 = vmatprep.subr.bf16.mxu0 0
  %963 = vmatpush1.bf16.msra.mxu0 0
  %964 = vmatprep.subr.bf16.mxu0 0
  %965 = vmatpush1.bf16.msra.mxu0 0
  %966 = vmatprep.subr.bf16.mxu0 0
  %967 = vmatpush1.bf16.msra.mxu0 0
  %968 = vmatprep.subr.bf16.mxu0 0
  %969 = vmatpush1.bf16.msra.mxu0 0
  %970 = vmatprep.subr.bf16.mxu0 0
  %971 = vmatpush1.bf16.msra.mxu0 0
  %972 = vmatprep.subr.bf16.mxu0 0
  %973 = vmatpush1.bf16.msra.mxu0 0
  %974 = vmatprep.subr.bf16.mxu0 0
  %975 = vmatpush1.bf16.msra.mxu0 0
  %976 = vmatprep.subr.bf16.mxu0 0
  %977 = vmatpush1.bf16.msra.mxu0 0
  %978 = vmatprep.mubr.bf16.mxu0 0
  %979 = vmatmul.mubr.bf16.gmra.mrb[0].mxu0 %v902
  %v980 = vpop.f32.mrb[0].mxu0
  %v981 = vadd.f32 0.0, %v980
  %v982 = vpop.f32.mrb[0].mxu0
  %v983 = vpop.f32.mrb[0].mxu0
  %v984 = vadd.f32 0.0, %v983
  %v985 = vpop.f32.mrb[0].mxu0
  %986 = vdwg.mxu0
  %v987 = vadd.f32 %v896, %v938
  %v988 = vadd.f32 %v899, %v942
  %v989 = vxor.u32 %v987, 2147483648
  %v990 = vxor.u32 %v988, 2147483648
  %v991 = vmul.f32 %v989, 1.442695
  %v992 = vpow.pop %v991
  %v993 = vmul.f32 %v990, 1.442695
  %v994 = vpow.pop %v993
  %v995 = vadd.f32 %v992, 1.0
  %v996 = vadd.f32 %v994, 1.0
  %v997 = vrcp.pop %v995
  %v998 = vmul.f32 1.0, %v997
  %v999 = vrcp.pop %v996
  %v1000 = vmul.f32 1.0, %v999
  %v1001 = vadd.f32 %v897, %v940
  %v1002 = vadd.f32 %v900, %v944
  %v1003 = vxor.u32 %v1001, 2147483648
  %v1004 = vxor.u32 %v1002, 2147483648
  %v1005 = vmul.f32 %v1003, 1.442695
  %v1006 = vpow.pop %v1005
  %v1007 = vmul.f32 %v1004, 1.442695
  %v1008 = vpow.pop %v1007
  %v1009 = vadd.f32 %v1006, 1.0
  %v1010 = vadd.f32 %v1008, 1.0
  %v1011 = vrcp.pop %v1009
  %v1012 = vmul.f32 1.0, %v1011
  %v1013 = vrcp.pop %v1010
  %v1014 = vmul.f32 1.0, %v1013
  %v1015 = vadd.f32 %v981, %v709
  %v1016 = vadd.f32 %v984, %v709
  %v1017 = vmul.f32 %v998, %v1015
  %v1018 = vmul.f32 %v1000, %v1016
  %v1019 = vadd.f32 %v898, %v1017
  %v1020 = vadd.f32 %v901, %v1018
  %v1021 = vtanh.pop %v1019
  %v1022 = vtanh.pop %v1020
  %v1023 = vsub.f32 1.0, %v1012
  %v1024 = vsub.f32 1.0, %v1014
  %v1025 = vmul.f32 %v1023, %v1021
  %v1026 = vmul.f32 %v1024, %v1022
  %v1027 = vmul.f32 %v1012, %v891
  %v1028 = vmul.f32 %v1014, %v892
  %v1029 = vadd.f32 %v1025, %v1027
  %v1030 = vadd.f32 %v1026, %v1028
  %vm1031 = vcmp.gt.s32.totalorder %v454, 2
  %vm1032 = vcmp.gt.s32.totalorder %v455, 2
  %v1033 = vsel %vm1031, 1, 0
  %v1034 = vsel %vm1032, 1, 0
  %1035 = vset.pattern.permute.xlu0 0
  %1036 = vperm.xlu0 %1035, %v1033
  %v1037 = vpop.permute.xlu0 %1036
  %1038 = vset.pattern.permute.xlu0 0
  %1039 = vperm.xlu0 %1038, %v1034
  %v1040 = vpop.permute.xlu0 %1039
  %vm1041 = vcmp.eq.s32.totalorder %v1037, 1
  %vm1042 = vcmp.eq.s32.totalorder %v1040, 1
  %v1043 = vsel %vm1041, %v1029, %v891
  %v1044 = vsel %vm1042, %v1030, %v892
  %s1045 = smul.u32 6, 3
  %s1046 = smul.addr %s1045, 8
  %s1047 = scalar_lea.vmem [#allocation2], %s1046
  %v1048 = vld [vmem:[%s1047] sm:$0xff]
  %v1049 = vld [vmem:[%s1047 + $0x8] sm:$0xff]
  %v1050 = vld [vmem:[%s1047 + $0x10] sm:$0xff]
  %v1051 = vld [vmem:[%s1047 + $0x18] sm:$0xff]
  %v1052 = vld [vmem:[%s1047 + $0x20] sm:$0xff]
  %v1053 = vld [vmem:[%s1047 + $0x28] sm:$0xff]
  %v1054 = vpack.c.bf16 %v1044, %v1043
  %1055 = vmatprep.subr.bf16.mxu0 %v546
  %1056 = vmatpush1.bf16.msra.mxu0 %v545
  %1057 = vmatprep.subr.bf16.mxu0 %v549
  %1058 = vmatpush1.bf16.msra.mxu0 %v548
  %1059 = vmatprep.subr.bf16.mxu0 %v552
  %1060 = vmatpush1.bf16.msra.mxu0 %v551
  %1061 = vmatprep.subr.bf16.mxu0 %v555
  %1062 = vmatpush1.bf16.msra.mxu0 %v554
  %1063 = vmatprep.subr.bf16.mxu0 %v558
  %1064 = vmatpush1.bf16.msra.mxu0 %v557
  %1065 = vmatprep.subr.bf16.mxu0 %v561
  %1066 = vmatpush1.bf16.msra.mxu0 %v560
  %1067 = vmatprep.subr.bf16.mxu0 %v564
  %1068 = vmatpush1.bf16.msra.mxu0 %v563
  %1069 = vmatprep.subr.bf16.mxu0 %v567
  %1070 = vmatpush1.bf16.msra.mxu0 %v566
  %1071 = vmatprep.subr.bf16.mxu0 0
  %1072 = vmatpush1.bf16.msra.mxu0 0
  %1073 = vmatprep.subr.bf16.mxu0 0
  %1074 = vmatpush1.bf16.msra.mxu0 0
  %1075 = vmatprep.subr.bf16.mxu0 0
  %1076 = vmatpush1.bf16.msra.mxu0 0
  %1077 = vmatprep.subr.bf16.mxu0 0
  %1078 = vmatpush1.bf16.msra.mxu0 0
  %1079 = vmatprep.subr.bf16.mxu0 0
  %1080 = vmatpush1.bf16.msra.mxu0 0
  %1081 = vmatprep.subr.bf16.mxu0 0
  %1082 = vmatpush1.bf16.msra.mxu0 0
  %1083 = vmatprep.subr.bf16.mxu0 0
  %1084 = vmatpush1.bf16.msra.mxu0 0
  %1085 = vmatprep.subr.bf16.mxu0 0
  %1086 = vmatpush1.bf16.msra.mxu0 0
  %1087 = vmatprep.mubr.bf16.mxu0 0
  %1088 = vmatmul.mubr.bf16.gmra.mrb[0].mxu0 %v1054
  %v1089 = vpop.f32.mrb[0].mxu0
  %v1090 = vadd.f32 0.0, %v1089
  %v1091 = vpop.f32.mrb[0].mxu0
  %v1092 = vadd.f32 0.0, %v1091
  %v1093 = vpop.f32.mrb[0].mxu0
  %v1094 = vadd.f32 0.0, %v1093
  %v1095 = vpop.f32.mrb[0].mxu0
  %v1096 = vadd.f32 0.0, %v1095
  %1097 = vdwg.mxu0
  %1098 = vmatprep.subr.bf16.mxu0 0
  %1099 = vmatpush1.bf16.msra.mxu0 %v547
  %1100 = vmatprep.subr.bf16.mxu0 0
  %1101 = vmatpush1.bf16.msra.mxu0 %v550
  %1102 = vmatprep.subr.bf16.mxu0 0
  %1103 = vmatpush1.bf16.msra.mxu0 %v553
  %1104 = vmatprep.subr.bf16.mxu0 0
  %1105 = vmatpush1.bf16.msra.mxu0 %v556
  %1106 = vmatprep.subr.bf16.mxu0 0
  %1107 = vmatpush1.bf16.msra.mxu0 %v559
  %1108 = vmatprep.subr.bf16.mxu0 0
  %1109 = vmatpush1.bf16.msra.mxu0 %v562
  %1110 = vmatprep.subr.bf16.mxu0 0
  %1111 = vmatpush1.bf16.msra.mxu0 %v565
  %1112 = vmatprep.subr.bf16.mxu0 0
  %1113 = vmatpush1.bf16.msra.mxu0 %v568
  %1114 = vmatprep.subr.bf16.mxu0 0
  %1115 = vmatpush1.bf16.msra.mxu0 0
  %1116 = vmatprep.subr.bf16.mxu0 0
  %1117 = vmatpush1.bf16.msra.mxu0 0
  %1118 = vmatprep.subr.bf16.mxu0 0
  %1119 = vmatpush1.bf16.msra.mxu0 0
  %1120 = vmatprep.subr.bf16.mxu0 0
  %1121 = vmatpush1.bf16.msra.mxu0 0
  %1122 = vmatprep.subr.bf16.mxu0 0
  %1123 = vmatpush1.bf16.msra.mxu0 0
  %1124 = vmatprep.subr.bf16.mxu0 0
  %1125 = vmatpush1.bf16.msra.mxu0 0
  %1126 = vmatprep.subr.bf16.mxu0 0
  %1127 = vmatpush1.bf16.msra.mxu0 0
  %1128 = vmatprep.subr.bf16.mxu0 0
  %1129 = vmatpush1.bf16.msra.mxu0 0
  %1130 = vmatprep.mubr.bf16.mxu0 0
  %1131 = vmatmul.mubr.bf16.gmra.mrb[0].mxu0 %v1054
  %v1132 = vpop.f32.mrb[0].mxu0
  %v1133 = vadd.f32 0.0, %v1132
  %v1134 = vpop.f32.mrb[0].mxu0
  %v1135 = vpop.f32.mrb[0].mxu0
  %v1136 = vadd.f32 0.0, %v1135
  %v1137 = vpop.f32.mrb[0].mxu0
  %1138 = vdwg.mxu0
  %v1139 = vadd.f32 %v1048, %v1090
  %v1140 = vadd.f32 %v1051, %v1094
  %v1141 = vxor.u32 %v1139, 2147483648
  %v1142 = vxor.u32 %v1140, 2147483648
  %v1143 = vmul.f32 %v1141, 1.442695
  %v1144 = vpow.pop %v1143
  %v1145 = vmul.f32 %v1142, 1.442695
  %v1146 = vpow.pop %v1145
  %v1147 = vadd.f32 %v1144, 1.0
  %v1148 = vadd.f32 %v1146, 1.0
  %v1149 = vrcp.pop %v1147
  %v1150 = vmul.f32 1.0, %v1149
  %v1151 = vrcp.pop %v1148
  %v1152 = vmul.f32 1.0, %v1151
  %v1153 = vadd.f32 %v1049, %v1092
  %v1154 = vadd.f32 %v1052, %v1096
  %v1155 = vxor.u32 %v1153, 2147483648
  %v1156 = vxor.u32 %v1154, 2147483648
  %v1157 = vmul.f32 %v1155, 1.442695
  %v1158 = vpow.pop %v1157
  %v1159 = vmul.f32 %v1156, 1.442695
  %v1160 = vpow.pop %v1159
  %v1161 = vadd.f32 %v1158, 1.0
  %v1162 = vadd.f32 %v1160, 1.0
  %v1163 = vrcp.pop %v1161
  %v1164 = vmul.f32 1.0, %v1163
  %v1165 = vrcp.pop %v1162
  %v1166 = vmul.f32 1.0, %v1165
  %v1167 = vadd.f32 %v1133, %v709
  %v1168 = vadd.f32 %v1136, %v709
  %v1169 = vmul.f32 %v1150, %v1167
  %v1170 = vmul.f32 %v1152, %v1168
  %v1171 = vadd.f32 %v1050, %v1169
  %v1172 = vadd.f32 %v1053, %v1170
  %v1173 = vtanh.pop %v1171
  %v1174 = vtanh.pop %v1172
  %v1175 = vsub.f32 1.0, %v1164
  %v1176 = vsub.f32 1.0, %v1166
  %v1177 = vmul.f32 %v1175, %v1173
  %v1178 = vmul.f32 %v1176, %v1174
  %v1179 = vmul.f32 %v1164, %v1043
  %v1180 = vmul.f32 %v1166, %v1044
  %v1181 = vadd.f32 %v1177, %v1179
  %v1182 = vadd.f32 %v1178, %v1180
  %vm1183 = vcmp.gt.s32.totalorder %v454, 3
  %vm1184 = vcmp.gt.s32.totalorder %v455, 3
  %v1185 = vsel %vm1183, 1, 0
  %v1186 = vsel %vm1184, 1, 0
  %1187 = vset.pattern.permute.xlu0 0
  %1188 = vperm.xlu0 %1187, %v1185
  %v1189 = vpop.permute.xlu0 %1188
  %1190 = vset.pattern.permute.xlu0 0
  %1191 = vperm.xlu0 %1190, %v1186
  %v1192 = vpop.permute.xlu0 %1191
  %vm1193 = vcmp.eq.s32.totalorder %v1189, 1
  %vm1194 = vcmp.eq.s32.totalorder %v1192, 1
  %v1195 = vsel %vm1193, %v1181, %v1043
  %v1196 = vsel %vm1194, %v1182, %v1044
  %s1197 = smul.u32 8, 3
  %s1198 = smul.addr %s1197, 8
  %s1199 = scalar_lea.vmem [#allocation2], %s1198
  %v1200 = vld [vmem:[%s1199] sm:$0xff]
  %v1201 = vld [vmem:[%s1199 + $0x8] sm:$0xff]
  %v1202 = vld [vmem:[%s1199 + $0x10] sm:$0xff]
  %v1203 = vld [vmem:[%s1199 + $0x18] sm:$0xff]
  %v1204 = vld [vmem:[%s1199 + $0x20] sm:$0xff]
  %v1205 = vld [vmem:[%s1199 + $0x28] sm:$0xff]
  %v1206 = vpack.c.bf16 %v1196, %v1195
  %1207 = vmatprep.subr.bf16.mxu0 %v546
  %1208 = vmatpush1.bf16.msra.mxu0 %v545
  %1209 = vmatprep.subr.bf16.mxu0 %v549
  %1210 = vmatpush1.bf16.msra.mxu0 %v548
  %1211 = vmatprep.subr.bf16.mxu0 %v552
  %1212 = vmatpush1.bf16.msra.mxu0 %v551
  %1213 = vmatprep.subr.bf16.mxu0 %v555
  %1214 = vmatpush1.bf16.msra.mxu0 %v554
  %1215 = vmatprep.subr.bf16.mxu0 %v558
  %1216 = vmatpush1.bf16.msra.mxu0 %v557
  %1217 = vmatprep.subr.bf16.mxu0 %v561
  %1218 = vmatpush1.bf16.msra.mxu0 %v560
  %1219 = vmatprep.subr.bf16.mxu0 %v564
  %1220 = vmatpush1.bf16.msra.mxu0 %v563
  %1221 = vmatprep.subr.bf16.mxu0 %v567
  %1222 = vmatpush1.bf16.msra.mxu0 %v566
  %1223 = vmatprep.subr.bf16.mxu0 0
  %1224 = vmatpush1.bf16.msra.mxu0 0
  %1225 = vmatprep.subr.bf16.mxu0 0
  %1226 = vmatpush1.bf16.msra.mxu0 0
  %1227 = vmatprep.subr.bf16.mxu0 0
  %1228 = vmatpush1.bf16.msra.mxu0 0
  %1229 = vmatprep.subr.bf16.mxu0 0
  %1230 = vmatpush1.bf16.msra.mxu0 0
  %1231 = vmatprep.subr.bf16.mxu0 0
  %1232 = vmatpush1.bf16.msra.mxu0 0
  %1233 = vmatprep.subr.bf16.mxu0 0
  %1234 = vmatpush1.bf16.msra.mxu0 0
  %1235 = vmatprep.subr.bf16.mxu0 0
  %1236 = vmatpush1.bf16.msra.mxu0 0
  %1237 = vmatprep.subr.bf16.mxu0 0
  %1238 = vmatpush1.bf16.msra.mxu0 0
  %1239 = vmatprep.mubr.bf16.mxu0 0
  %1240 = vmatmul.mubr.bf16.gmra.mrb[0].mxu0 %v1206
  %v1241 = vpop.f32.mrb[0].mxu0
  %v1242 = vadd.f32 0.0, %v1241
  %v1243 = vpop.f32.mrb[0].mxu0
  %v1244 = vadd.f32 0.0, %v1243
  %v1245 = vpop.f32.mrb[0].mxu0
  %v1246 = vadd.f32 0.0, %v1245
  %v1247 = vpop.f32.mrb[0].mxu0
  %v1248 = vadd.f32 0.0, %v1247
  %1249 = vdwg.mxu0
  %1250 = vmatprep.subr.bf16.mxu0 0
  %1251 = vmatpush1.bf16.msra.mxu0 %v547
  %1252 = vmatprep.subr.bf16.mxu0 0
  %1253 = vmatpush1.bf16.msra.mxu0 %v550
  %1254 = vmatprep.subr.bf16.mxu0 0
  %1255 = vmatpush1.bf16.msra.mxu0 %v553
  %1256 = vmatprep.subr.bf16.mxu0 0
  %1257 = vmatpush1.bf16.msra.mxu0 %v556
  %1258 = vmatprep.subr.bf16.mxu0 0
  %1259 = vmatpush1.bf16.msra.mxu0 %v559
  %1260 = vmatprep.subr.bf16.mxu0 0
  %1261 = vmatpush1.bf16.msra.mxu0 %v562
  %1262 = vmatprep.subr.bf16.mxu0 0
  %1263 = vmatpush1.bf16.msra.mxu0 %v565
  %1264 = vmatprep.subr.bf16.mxu0 0
  %1265 = vmatpush1.bf16.msra.mxu0 %v568
  %1266 = vmatprep.subr.bf16.mxu0 0
  %1267 = vmatpush1.bf16.msra.mxu0 0
  %1268 = vmatprep.subr.bf16.mxu0 0
  %1269 = vmatpush1.bf16.msra.mxu0 0
  %1270 = vmatprep.subr.bf16.mxu0 0
  %1271 = vmatpush1.bf16.msra.mxu0 0
  %1272 = vmatprep.subr.bf16.mxu0 0
  %1273 = vmatpush1.bf16.msra.mxu0 0
  %1274 = vmatprep.subr.bf16.mxu0 0
  %1275 = vmatpush1.bf16.msra.mxu0 0
  %1276 = vmatprep.subr.bf16.mxu0 0
  %1277 = vmatpush1.bf16.msra.mxu0 0
  %1278 = vmatprep.subr.bf16.mxu0 0
  %1279 = vmatpush1.bf16.msra.mxu0 0
  %1280 = vmatprep.subr.bf16.mxu0 0
  %1281 = vmatpush1.bf16.msra.mxu0 0
  %1282 = vmatprep.mubr.bf16.mxu0 0
  %1283 = vmatmul.mubr.bf16.gmra.mrb[0].mxu0 %v1206
  %v1284 = vpop.f32.mrb[0].mxu0
  %v1285 = vadd.f32 0.0, %v1284
  %v1286 = vpop.f32.mrb[0].mxu0
  %v1287 = vpop.f32.mrb[0].mxu0
  %v1288 = vadd.f32 0.0, %v1287
  %v1289 = vpop.f32.mrb[0].mxu0
  %1290 = vdwg.mxu0
  %v1291 = vadd.f32 %v1200, %v1242
  %v1292 = vadd.f32 %v1203, %v1246
  %v1293 = vxor.u32 %v1291, 2147483648
  %v1294 = vxor.u32 %v1292, 2147483648
  %v1295 = vmul.f32 %v1293, 1.442695
  %v1296 = vpow.pop %v1295
  %v1297 = vmul.f32 %v1294, 1.442695
  %v1298 = vpow.pop %v1297
  %v1299 = vadd.f32 %v1296, 1.0
  %v1300 = vadd.f32 %v1298, 1.0
  %v1301 = vrcp.pop %v1299
  %v1302 = vmul.f32 1.0, %v1301
  %v1303 = vrcp.pop %v1300
  %v1304 = vmul.f32 1.0, %v1303
  %v1305 = vadd.f32 %v1201, %v1244
  %v1306 = vadd.f32 %v1204, %v1248
  %v1307 = vxor.u32 %v1305, 2147483648
  %v1308 = vxor.u32 %v1306, 2147483648
  %v1309 = vmul.f32 %v1307, 1.442695
  %v1310 = vpow.pop %v1309
  %v1311 = vmul.f32 %v1308, 1.442695
  %v1312 = vpow.pop %v1311
  %v1313 = vadd.f32 %v1310, 1.0
  %v1314 = vadd.f32 %v1312, 1.0
  %v1315 = vrcp.pop %v1313
  %v1316 = vmul.f32 1.0, %v1315
  %v1317 = vrcp.pop %v1314
  %v1318 = vmul.f32 1.0, %v1317
  %v1319 = vadd.f32 %v1285, %v709
  %v1320 = vadd.f32 %v1288, %v709
  %v1321 = vmul.f32 %v1302, %v1319
  %v1322 = vmul.f32 %v1304, %v1320
  %v1323 = vadd.f32 %v1202, %v1321
  %v1324 = vadd.f32 %v1205, %v1322
  %v1325 = vtanh.pop %v1323
  %v1326 = vtanh.pop %v1324
  %v1327 = vsub.f32 1.0, %v1316
  %v1328 = vsub.f32 1.0, %v1318
  %v1329 = vmul.f32 %v1327, %v1325
  %v1330 = vmul.f32 %v1328, %v1326
  %v1331 = vmul.f32 %v1316, %v1195
  %v1332 = vmul.f32 %v1318, %v1196
  %v1333 = vadd.f32 %v1329, %v1331
  %v1334 = vadd.f32 %v1330, %v1332
  %vm1335 = vcmp.gt.s32.totalorder %v454, 4
  %vm1336 = vcmp.gt.s32.totalorder %v455, 4
  %v1337 = vsel %vm1335, 1, 0
  %v1338 = vsel %vm1336, 1, 0
  %1339 = vset.pattern.permute.xlu0 0
  %1340 = vperm.xlu0 %1339, %v1337
  %v1341 = vpop.permute.xlu0 %1340
  %1342 = vset.pattern.permute.xlu0 0
  %1343 = vperm.xlu0 %1342, %v1338
  %v1344 = vpop.permute.xlu0 %1343
  %vm1345 = vcmp.eq.s32.totalorder %v1341, 1
  %vm1346 = vcmp.eq.s32.totalorder %v1344, 1
  %v1347 = vsel %vm1345, %v1333, %v1195
  %v1348 = vsel %vm1346, %v1334, %v1196
  %s1349 = smul.u32 10, 3
  %s1350 = smul.addr %s1349, 8
  %s1351 = scalar_lea.vmem [#allocation2], %s1350
  %v1352 = vld [vmem:[%s1351] sm:$0xff]
  %v1353 = vld [vmem:[%s1351 + $0x8] sm:$0xff]
  %v1354 = vld [vmem:[%s1351 + $0x10] sm:$0xff]
  %v1355 = vld [vmem:[%s1351 + $0x18] sm:$0xff]
  %v1356 = vld [vmem:[%s1351 + $0x20] sm:$0xff]
  %v1357 = vld [vmem:[%s1351 + $0x28] sm:$0xff]
  %v1358 = vpack.c.bf16 %v1348, %v1347
  %1359 = vmatprep.subr.bf16.mxu0 %v546
  %1360 = vmatpush1.bf16.msra.mxu0 %v545
  %1361 = vmatprep.subr.bf16.mxu0 %v549
  %1362 = vmatpush1.bf16.msra.mxu0 %v548
  %1363 = vmatprep.subr.bf16.mxu0 %v552
  %1364 = vmatpush1.bf16.msra.mxu0 %v551
  %1365 = vmatprep.subr.bf16.mxu0 %v555
  %1366 = vmatpush1.bf16.msra.mxu0 %v554
  %1367 = vmatprep.subr.bf16.mxu0 %v558
  %1368 = vmatpush1.bf16.msra.mxu0 %v557
  %1369 = vmatprep.subr.bf16.mxu0 %v561
  %1370 = vmatpush1.bf16.msra.mxu0 %v560
  %1371 = vmatprep.subr.bf16.mxu0 %v564
  %1372 = vmatpush1.bf16.msra.mxu0 %v563
  %1373 = vmatprep.subr.bf16.mxu0 %v567
  %1374 = vmatpush1.bf16.msra.mxu0 %v566
  %1375 = vmatprep.subr.bf16.mxu0 0
  %1376 = vmatpush1.bf16.msra.mxu0 0
  %1377 = vmatprep.subr.bf16.mxu0 0
  %1378 = vmatpush1.bf16.msra.mxu0 0
  %1379 = vmatprep.subr.bf16.mxu0 0
  %1380 = vmatpush1.bf16.msra.mxu0 0
  %1381 = vmatprep.subr.bf16.mxu0 0
  %1382 = vmatpush1.bf16.msra.mxu0 0
  %1383 = vmatprep.subr.bf16.mxu0 0
  %1384 = vmatpush1.bf16.msra.mxu0 0
  %1385 = vmatprep.subr.bf16.mxu0 0
  %1386 = vmatpush1.bf16.msra.mxu0 0
  %1387 = vmatprep.subr.bf16.mxu0 0
  %1388 = vmatpush1.bf16.msra.mxu0 0
  %1389 = vmatprep.subr.bf16.mxu0 0
  %1390 = vmatpush1.bf16.msra.mxu0 0
  %1391 = vmatprep.mubr.bf16.mxu0 0
  %1392 = vmatmul.mubr.bf16.gmra.mrb[0].mxu0 %v1358
  %v1393 = vpop.f32.mrb[0].mxu0
  %v1394 = vadd.f32 0.0, %v1393
  %v1395 = vpop.f32.mrb[0].mxu0
  %v1396 = vadd.f32 0.0, %v1395
  %v1397 = vpop.f32.mrb[0].mxu0
  %v1398 = vadd.f32 0.0, %v1397
  %v1399 = vpop.f32.mrb[0].mxu0
  %v1400 = vadd.f32 0.0, %v1399
  %1401 = vdwg.mxu0
  %1402 = vmatprep.subr.bf16.mxu0 0
  %1403 = vmatpush1.bf16.msra.mxu0 %v547
  %1404 = vmatprep.subr.bf16.mxu0 0
  %1405 = vmatpush1.bf16.msra.mxu0 %v550
  %1406 = vmatprep.subr.bf16.mxu0 0
  %1407 = vmatpush1.bf16.msra.mxu0 %v553
  %1408 = vmatprep.subr.bf16.mxu0 0
  %1409 = vmatpush1.bf16.msra.mxu0 %v556
  %1410 = vmatprep.subr.bf16.mxu0 0
  %1411 = vmatpush1.bf16.msra.mxu0 %v559
  %1412 = vmatprep.subr.bf16.mxu0 0
  %1413 = vmatpush1.bf16.msra.mxu0 %v562
  %1414 = vmatprep.subr.bf16.mxu0 0
  %1415 = vmatpush1.bf16.msra.mxu0 %v565
  %1416 = vmatprep.subr.bf16.mxu0 0
  %1417 = vmatpush1.bf16.msra.mxu0 %v568
  %1418 = vmatprep.subr.bf16.mxu0 0
  %1419 = vmatpush1.bf16.msra.mxu0 0
  %1420 = vmatprep.subr.bf16.mxu0 0
  %1421 = vmatpush1.bf16.msra.mxu0 0
  %1422 = vmatprep.subr.bf16.mxu0 0
  %1423 = vmatpush1.bf16.msra.mxu0 0
  %1424 = vmatprep.subr.bf16.mxu0 0
  %1425 = vmatpush1.bf16.msra.mxu0 0
  %1426 = vmatprep.subr.bf16.mxu0 0
  %1427 = vmatpush1.bf16.msra.mxu0 0
  %1428 = vmatprep.subr.bf16.mxu0 0
  %1429 = vmatpush1.bf16.msra.mxu0 0
  %1430 = vmatprep.subr.bf16.mxu0 0
  %1431 = vmatpush1.bf16.msra.mxu0 0
  %1432 = vmatprep.subr.bf16.mxu0 0
  %1433 = vmatpush1.bf16.msra.mxu0 0
  %1434 = vmatprep.mubr.bf16.mxu0 0
  %1435 = vmatmul.mubr.bf16.gmra.mrb[0].mxu0 %v1358
  %v1436 = vpop.f32.mrb[0].mxu0
  %v1437 = vadd.f32 0.0, %v1436
  %v1438 = vpop.f32.mrb[0].mxu0
  %v1439 = vpop.f32.mrb[0].mxu0
  %v1440 = vadd.f32 0.0, %v1439
  %v1441 = vpop.f32.mrb[0].mxu0
  %1442 = vdwg.mxu0
  %v1443 = vadd.f32 %v1352, %v1394
  %v1444 = vadd.f32 %v1355, %v1398
  %v1445 = vxor.u32 %v1443, 2147483648
  %v1446 = vxor.u32 %v1444, 2147483648
  %v1447 = vmul.f32 %v1445, 1.442695
  %v1448 = vpow.pop %v1447
  %v1449 = vmul.f32 %v1446, 1.442695
  %v1450 = vpow.pop %v1449
  %v1451 = vadd.f32 %v1448, 1.0
  %v1452 = vadd.f32 %v1450, 1.0
  %v1453 = vrcp.pop %v1451
  %v1454 = vmul.f32 1.0, %v1453
  %v1455 = vrcp.pop %v1452
  %v1456 = vmul.f32 1.0, %v1455
  %v1457 = vadd.f32 %v1353, %v1396
  %v1458 = vadd.f32 %v1356, %v1400
  %v1459 = vxor.u32 %v1457, 2147483648
  %v1460 = vxor.u32 %v1458, 2147483648
  %v1461 = vmul.f32 %v1459, 1.442695
  %v1462 = vpow.pop %v1461
  %v1463 = vmul.f32 %v1460, 1.442695
  %v1464 = vpow.pop %v1463
  %v1465 = vadd.f32 %v1462, 1.0
  %v1466 = vadd.f32 %v1464, 1.0
  %v1467 = vrcp.pop %v1465
  %v1468 = vmul.f32 1.0, %v1467
  %v1469 = vrcp.pop %v1466
  %v1470 = vmul.f32 1.0, %v1469
  %v1471 = vadd.f32 %v1437, %v709
  %v1472 = vadd.f32 %v1440, %v709
  %v1473 = vmul.f32 %v1454, %v1471
  %v1474 = vmul.f32 %v1456, %v1472
  %v1475 = vadd.f32 %v1354, %v1473
  %v1476 = vadd.f32 %v1357, %v1474
  %v1477 = vtanh.pop %v1475
  %v1478 = vtanh.pop %v1476
  %v1479 = vsub.f32 1.0, %v1468
  %v1480 = vsub.f32 1.0, %v1470
  %v1481 = vmul.f32 %v1479, %v1477
  %v1482 = vmul.f32 %v1480, %v1478
  %v1483 = vmul.f32 %v1468, %v1347
  %v1484 = vmul.f32 %v1470, %v1348
  %v1485 = vadd.f32 %v1481, %v1483
  %v1486 = vadd.f32 %v1482, %v1484
  %vm1487 = vcmp.gt.s32.totalorder %v454, 5
  %vm1488 = vcmp.gt.s32.totalorder %v455, 5
  %v1489 = vsel %vm1487, 1, 0
  %v1490 = vsel %vm1488, 1, 0
  %1491 = vset.pattern.permute.xlu0 0
  %1492 = vperm.xlu0 %1491, %v1489
  %v1493 = vpop.permute.xlu0 %1492
  %1494 = vset.pattern.permute.xlu0 0
  %1495 = vperm.xlu0 %1494, %v1490
  %v1496 = vpop.permute.xlu0 %1495
  %vm1497 = vcmp.eq.s32.totalorder %v1493, 1
  %vm1498 = vcmp.eq.s32.totalorder %v1496, 1
  %v1499 = vsel %vm1497, %v1485, %v1347
  %v1500 = vsel %vm1498, %v1486, %v1348
  %s1501 = smul.u32 12, 3
  %s1502 = smul.addr %s1501, 8
  %s1503 = scalar_lea.vmem [#allocation2], %s1502
  %v1504 = vld [vmem:[%s1503] sm:$0xff]
  %v1505 = vld [vmem:[%s1503 + $0x8] sm:$0xff]
  %v1506 = vld [vmem:[%s1503 + $0x10] sm:$0xff]
  %v1507 = vld [vmem:[%s1503 + $0x18] sm:$0xff]
  %v1508 = vld [vmem:[%s1503 + $0x20] sm:$0xff]
  %v1509 = vld [vmem:[%s1503 + $0x28] sm:$0xff]
  %v1510 = vpack.c.bf16 %v1500, %v1499
  %1511 = vmatprep.subr.bf16.mxu0 %v546
  %1512 = vmatpush1.bf16.msra.mxu0 %v545
  %1513 = vmatprep.subr.bf16.mxu0 %v549
  %1514 = vmatpush1.bf16.msra.mxu0 %v548
  %1515 = vmatprep.subr.bf16.mxu0 %v552
  %1516 = vmatpush1.bf16.msra.mxu0 %v551
  %1517 = vmatprep.subr.bf16.mxu0 %v555
  %1518 = vmatpush1.bf16.msra.mxu0 %v554
  %1519 = vmatprep.subr.bf16.mxu0 %v558
  %1520 = vmatpush1.bf16.msra.mxu0 %v557
  %1521 = vmatprep.subr.bf16.mxu0 %v561
  %1522 = vmatpush1.bf16.msra.mxu0 %v560
  %1523 = vmatprep.subr.bf16.mxu0 %v564
  %1524 = vmatpush1.bf16.msra.mxu0 %v563
  %1525 = vmatprep.subr.bf16.mxu0 %v567
  %1526 = vmatpush1.bf16.msra.mxu0 %v566
  %1527 = vmatprep.subr.bf16.mxu0 0
  %1528 = vmatpush1.bf16.msra.mxu0 0
  %1529 = vmatprep.subr.bf16.mxu0 0
  %1530 = vmatpush1.bf16.msra.mxu0 0
  %1531 = vmatprep.subr.bf16.mxu0 0
  %1532 = vmatpush1.bf16.msra.mxu0 0
  %1533 = vmatprep.subr.bf16.mxu0 0
  %1534 = vmatpush1.bf16.msra.mxu0 0
  %1535 = vmatprep.subr.bf16.mxu0 0
  %1536 = vmatpush1.bf16.msra.mxu0 0
  %1537 = vmatprep.subr.bf16.mxu0 0
  %1538 = vmatpush1.bf16.msra.mxu0 0
  %1539 = vmatprep.subr.bf16.mxu0 0
  %1540 = vmatpush1.bf16.msra.mxu0 0
  %1541 = vmatprep.subr.bf16.mxu0 0
  %1542 = vmatpush1.bf16.msra.mxu0 0
  %1543 = vmatprep.mubr.bf16.mxu0 0
  %1544 = vmatmul.mubr.bf16.gmra.mrb[0].mxu0 %v1510
  %v1545 = vpop.f32.mrb[0].mxu0
  %v1546 = vadd.f32 0.0, %v1545
  %v1547 = vpop.f32.mrb[0].mxu0
  %v1548 = vadd.f32 0.0, %v1547
  %v1549 = vpop.f32.mrb[0].mxu0
  %v1550 = vadd.f32 0.0, %v1549
  %v1551 = vpop.f32.mrb[0].mxu0
  %v1552 = vadd.f32 0.0, %v1551
  %1553 = vdwg.mxu0
  %1554 = vmatprep.subr.bf16.mxu0 0
  %1555 = vmatpush1.bf16.msra.mxu0 %v547
  %1556 = vmatprep.subr.bf16.mxu0 0
  %1557 = vmatpush1.bf16.msra.mxu0 %v550
  %1558 = vmatprep.subr.bf16.mxu0 0
  %1559 = vmatpush1.bf16.msra.mxu0 %v553
  %1560 = vmatprep.subr.bf16.mxu0 0
  %1561 = vmatpush1.bf16.msra.mxu0 %v556
  %1562 = vmatprep.subr.bf16.mxu0 0
  %1563 = vmatpush1.bf16.msra.mxu0 %v559
  %1564 = vmatprep.subr.bf16.mxu0 0
  %1565 = vmatpush1.bf16.msra.mxu0 %v562
  %1566 = vmatprep.subr.bf16.mxu0 0
  %1567 = vmatpush1.bf16.msra.mxu0 %v565
  %1568 = vmatprep.subr.bf16.mxu0 0
  %1569 = vmatpush1.bf16.msra.mxu0 %v568
  %1570 = vmatprep.subr.bf16.mxu0 0
  %1571 = vmatpush1.bf16.msra.mxu0 0
  %1572 = vmatprep.subr.bf16.mxu0 0
  %1573 = vmatpush1.bf16.msra.mxu0 0
  %1574 = vmatprep.subr.bf16.mxu0 0
  %1575 = vmatpush1.bf16.msra.mxu0 0
  %1576 = vmatprep.subr.bf16.mxu0 0
  %1577 = vmatpush1.bf16.msra.mxu0 0
  %1578 = vmatprep.subr.bf16.mxu0 0
  %1579 = vmatpush1.bf16.msra.mxu0 0
  %1580 = vmatprep.subr.bf16.mxu0 0
  %1581 = vmatpush1.bf16.msra.mxu0 0
  %1582 = vmatprep.subr.bf16.mxu0 0
  %1583 = vmatpush1.bf16.msra.mxu0 0
  %1584 = vmatprep.subr.bf16.mxu0 0
  %1585 = vmatpush1.bf16.msra.mxu0 0
  %1586 = vmatprep.mubr.bf16.mxu0 0
  %1587 = vmatmul.mubr.bf16.gmra.mrb[0].mxu0 %v1510
  %v1588 = vpop.f32.mrb[0].mxu0
  %v1589 = vadd.f32 0.0, %v1588
  %v1590 = vpop.f32.mrb[0].mxu0
  %v1591 = vpop.f32.mrb[0].mxu0
  %v1592 = vadd.f32 0.0, %v1591
  %v1593 = vpop.f32.mrb[0].mxu0
  %1594 = vdwg.mxu0
  %v1595 = vadd.f32 %v1504, %v1546
  %v1596 = vadd.f32 %v1507, %v1550
  %v1597 = vxor.u32 %v1595, 2147483648
  %v1598 = vxor.u32 %v1596, 2147483648
  %v1599 = vmul.f32 %v1597, 1.442695
  %v1600 = vpow.pop %v1599
  %v1601 = vmul.f32 %v1598, 1.442695
  %v1602 = vpow.pop %v1601
  %v1603 = vadd.f32 %v1600, 1.0
  %v1604 = vadd.f32 %v1602, 1.0
  %v1605 = vrcp.pop %v1603
  %v1606 = vmul.f32 1.0, %v1605
  %v1607 = vrcp.pop %v1604
  %v1608 = vmul.f32 1.0, %v1607
  %v1609 = vadd.f32 %v1505, %v1548
  %v1610 = vadd.f32 %v1508, %v1552
  %v1611 = vxor.u32 %v1609, 2147483648
  %v1612 = vxor.u32 %v1610, 2147483648
  %v1613 = vmul.f32 %v1611, 1.442695
  %v1614 = vpow.pop %v1613
  %v1615 = vmul.f32 %v1612, 1.442695
  %v1616 = vpow.pop %v1615
  %v1617 = vadd.f32 %v1614, 1.0
  %v1618 = vadd.f32 %v1616, 1.0
  %v1619 = vrcp.pop %v1617
  %v1620 = vmul.f32 1.0, %v1619
  %v1621 = vrcp.pop %v1618
  %v1622 = vmul.f32 1.0, %v1621
  %v1623 = vadd.f32 %v1589, %v709
  %v1624 = vadd.f32 %v1592, %v709
  %v1625 = vmul.f32 %v1606, %v1623
  %v1626 = vmul.f32 %v1608, %v1624
  %v1627 = vadd.f32 %v1506, %v1625
  %v1628 = vadd.f32 %v1509, %v1626
  %v1629 = vtanh.pop %v1627
  %v1630 = vtanh.pop %v1628
  %v1631 = vsub.f32 1.0, %v1620
  %v1632 = vsub.f32 1.0, %v1622
  %v1633 = vmul.f32 %v1631, %v1629
  %v1634 = vmul.f32 %v1632, %v1630
  %v1635 = vmul.f32 %v1620, %v1499
  %v1636 = vmul.f32 %v1622, %v1500
  %v1637 = vadd.f32 %v1633, %v1635
  %v1638 = vadd.f32 %v1634, %v1636
  %vm1639 = vcmp.gt.s32.totalorder %v454, 6
  %vm1640 = vcmp.gt.s32.totalorder %v455, 6
  %v1641 = vsel %vm1639, 1, 0
  %v1642 = vsel %vm1640, 1, 0
  %1643 = vset.pattern.permute.xlu0 0
  %1644 = vperm.xlu0 %1643, %v1641
  %v1645 = vpop.permute.xlu0 %1644
  %1646 = vset.pattern.permute.xlu0 0
  %1647 = vperm.xlu0 %1646, %v1642
  %v1648 = vpop.permute.xlu0 %1647
  %vm1649 = vcmp.eq.s32.totalorder %v1645, 1
  %vm1650 = vcmp.eq.s32.totalorder %v1648, 1
  %v1651 = vsel %vm1649, %v1637, %v1499
  %v1652 = vsel %vm1650, %v1638, %v1500
  %s1653 = smul.u32 14, 3
  %s1654 = smul.addr %s1653, 8
  %s1655 = scalar_lea.vmem [#allocation2], %s1654
  %v1656 = vld [vmem:[%s1655] sm:$0xff]
  %v1657 = vld [vmem:[%s1655 + $0x8] sm:$0xff]
  %v1658 = vld [vmem:[%s1655 + $0x10] sm:$0xff]
  %v1659 = vld [vmem:[%s1655 + $0x18] sm:$0xff]
  %v1660 = vld [vmem:[%s1655 + $0x20] sm:$0xff]
  %v1661 = vld [vmem:[%s1655 + $0x28] sm:$0xff]
  %v1662 = vpack.c.bf16 %v1652, %v1651
  %1663 = vmatprep.subr.bf16.mxu0 %v546
  %1664 = vmatpush1.bf16.msra.mxu0 %v545
  %1665 = vmatprep.subr.bf16.mxu0 %v549
  %1666 = vmatpush1.bf16.msra.mxu0 %v548
  %1667 = vmatprep.subr.bf16.mxu0 %v552
  %1668 = vmatpush1.bf16.msra.mxu0 %v551
  %1669 = vmatprep.subr.bf16.mxu0 %v555
  %1670 = vmatpush1.bf16.msra.mxu0 %v554
  %1671 = vmatprep.subr.bf16.mxu0 %v558
  %1672 = vmatpush1.bf16.msra.mxu0 %v557
  %1673 = vmatprep.subr.bf16.mxu0 %v561
  %1674 = vmatpush1.bf16.msra.mxu0 %v560
  %1675 = vmatprep.subr.bf16.mxu0 %v564
  %1676 = vmatpush1.bf16.msra.mxu0 %v563
  %1677 = vmatprep.subr.bf16.mxu0 %v567
  %1678 = vmatpush1.bf16.msra.mxu0 %v566
  %1679 = vmatprep.subr.bf16.mxu0 0
  %1680 = vmatpush1.bf16.msra.mxu0 0
  %1681 = vmatprep.subr.bf16.mxu0 0
  %1682 = vmatpush1.bf16.msra.mxu0 0
  %1683 = vmatprep.subr.bf16.mxu0 0
  %1684 = vmatpush1.bf16.msra.mxu0 0
  %1685 = vmatprep.subr.bf16.mxu0 0
  %1686 = vmatpush1.bf16.msra.mxu0 0
  %1687 = vmatprep.subr.bf16.mxu0 0
  %1688 = vmatpush1.bf16.msra.mxu0 0
  %1689 = vmatprep.subr.bf16.mxu0 0
  %1690 = vmatpush1.bf16.msra.mxu0 0
  %1691 = vmatprep.subr.bf16.mxu0 0
  %1692 = vmatpush1.bf16.msra.mxu0 0
  %1693 = vmatprep.subr.bf16.mxu0 0
  %1694 = vmatpush1.bf16.msra.mxu0 0
  %1695 = vmatprep.mubr.bf16.mxu0 0
  %1696 = vmatmul.mubr.bf16.gmra.mrb[0].mxu0 %v1662
  %v1697 = vpop.f32.mrb[0].mxu0
  %v1698 = vadd.f32 0.0, %v1697
  %v1699 = vpop.f32.mrb[0].mxu0
  %v1700 = vadd.f32 0.0, %v1699
  %v1701 = vpop.f32.mrb[0].mxu0
  %v1702 = vadd.f32 0.0, %v1701
  %v1703 = vpop.f32.mrb[0].mxu0
  %v1704 = vadd.f32 0.0, %v1703
  %1705 = vdwg.mxu0
  %1706 = vmatprep.subr.bf16.mxu0 0
  %1707 = vmatpush1.bf16.msra.mxu0 %v547
  %1708 = vmatprep.subr.bf16.mxu0 0
  %1709 = vmatpush1.bf16.msra.mxu0 %v550
  %1710 = vmatprep.subr.bf16.mxu0 0
  %1711 = vmatpush1.bf16.msra.mxu0 %v553
  %1712 = vmatprep.subr.bf16.mxu0 0
  %1713 = vmatpush1.bf16.msra.mxu0 %v556
  %1714 = vmatprep.subr.bf16.mxu0 0
  %1715 = vmatpush1.bf16.msra.mxu0 %v559
  %1716 = vmatprep.subr.bf16.mxu0 0
  %1717 = vmatpush1.bf16.msra.mxu0 %v562
  %1718 = vmatprep.subr.bf16.mxu0 0
  %1719 = vmatpush1.bf16.msra.mxu0 %v565
  %1720 = vmatprep.subr.bf16.mxu0 0
  %1721 = vmatpush1.bf16.msra.mxu0 %v568
  %1722 = vmatprep.subr.bf16.mxu0 0
  %1723 = vmatpush1.bf16.msra.mxu0 0
  %1724 = vmatprep.subr.bf16.mxu0 0
  %1725 = vmatpush1.bf16.msra.mxu0 0
  %1726 = vmatprep.subr.bf16.mxu0 0
  %1727 = vmatpush1.bf16.msra.mxu0 0
  %1728 = vmatprep.subr.bf16.mxu0 0
  %1729 = vmatpush1.bf16.msra.mxu0 0
  %1730 = vmatprep.subr.bf16.mxu0 0
  %1731 = vmatpush1.bf16.msra.mxu0 0
  %1732 = vmatprep.subr.bf16.mxu0 0
  %1733 = vmatpush1.bf16.msra.mxu0 0
  %1734 = vmatprep.subr.bf16.mxu0 0
  %1735 = vmatpush1.bf16.msra.mxu0 0
  %1736 = vmatprep.subr.bf16.mxu0 0
  %1737 = vmatpush1.bf16.msra.mxu0 0
  %1738 = vmatprep.mubr.bf16.mxu0 0
  %1739 = vmatmul.mubr.bf16.gmra.mrb[0].mxu0 %v1662
  %v1740 = vpop.f32.mrb[0].mxu0
  %v1741 = vadd.f32 0.0, %v1740
  %v1742 = vpop.f32.mrb[0].mxu0
  %v1743 = vpop.f32.mrb[0].mxu0
  %v1744 = vadd.f32 0.0, %v1743
  %v1745 = vpop.f32.mrb[0].mxu0
  %1746 = vdwg.mxu0
  %v1747 = vadd.f32 %v1656, %v1698
  %v1748 = vadd.f32 %v1659, %v1702
  %v1749 = vxor.u32 %v1747, 2147483648
  %v1750 = vxor.u32 %v1748, 2147483648
  %v1751 = vmul.f32 %v1749, 1.442695
  %v1752 = vpow.pop %v1751
  %v1753 = vmul.f32 %v1750, 1.442695
  %v1754 = vpow.pop %v1753
  %v1755 = vadd.f32 %v1752, 1.0
  %v1756 = vadd.f32 %v1754, 1.0
  %v1757 = vrcp.pop %v1755
  %v1758 = vmul.f32 1.0, %v1757
  %v1759 = vrcp.pop %v1756
  %v1760 = vmul.f32 1.0, %v1759
  %v1761 = vadd.f32 %v1657, %v1700
  %v1762 = vadd.f32 %v1660, %v1704
  %v1763 = vxor.u32 %v1761, 2147483648
  %v1764 = vxor.u32 %v1762, 2147483648
  %v1765 = vmul.f32 %v1763, 1.442695
  %v1766 = vpow.pop %v1765
  %v1767 = vmul.f32 %v1764, 1.442695
  %v1768 = vpow.pop %v1767
  %v1769 = vadd.f32 %v1766, 1.0
  %v1770 = vadd.f32 %v1768, 1.0
  %v1771 = vrcp.pop %v1769
  %v1772 = vmul.f32 1.0, %v1771
  %v1773 = vrcp.pop %v1770
  %v1774 = vmul.f32 1.0, %v1773
  %v1775 = vadd.f32 %v1741, %v709
  %v1776 = vadd.f32 %v1744, %v709
  %v1777 = vmul.f32 %v1758, %v1775
  %v1778 = vmul.f32 %v1760, %v1776
  %v1779 = vadd.f32 %v1658, %v1777
  %v1780 = vadd.f32 %v1661, %v1778
  %v1781 = vtanh.pop %v1779
  %v1782 = vtanh.pop %v1780
  %v1783 = vsub.f32 1.0, %v1772
  %v1784 = vsub.f32 1.0, %v1774
  %v1785 = vmul.f32 %v1783, %v1781
  %v1786 = vmul.f32 %v1784, %v1782
  %v1787 = vmul.f32 %v1772, %v1651
  %v1788 = vmul.f32 %v1774, %v1652
  %v1789 = vadd.f32 %v1785, %v1787
  %v1790 = vadd.f32 %v1786, %v1788
  %vm1791 = vcmp.gt.s32.totalorder %v454, 7
  %vm1792 = vcmp.gt.s32.totalorder %v455, 7
  %v1793 = vsel %vm1791, 1, 0
  %v1794 = vsel %vm1792, 1, 0
  %1795 = vset.pattern.permute.xlu0 0
  %1796 = vperm.xlu0 %1795, %v1793
  %v1797 = vpop.permute.xlu0 %1796
  %1798 = vset.pattern.permute.xlu0 0
  %1799 = vperm.xlu0 %1798, %v1794
  %v1800 = vpop.permute.xlu0 %1799
  %vm1801 = vcmp.eq.s32.totalorder %v1797, 1
  %vm1802 = vcmp.eq.s32.totalorder %v1800, 1
  %v1803 = vsel %vm1801, %v1789, %v1651
  %v1804 = vsel %vm1802, %v1790, %v1652
  %v1805 = vpack.c.bf16 %v1804, %v1803
  %v1806 = vld [vmem:[%s8] sm:$0xf]
  %v1807 = vld [vmem:[%s8 + $0x4] sm:$0xf]
  %v1808 = vld [vmem:[%s8 + $0x8] sm:$0xf]
  %v1809 = vld [vmem:[%s8 + $0xc] sm:$0xf]
  %v1810 = vld [vmem:[%s8 + $0x10] sm:$0xf]
  %v1811 = vld [vmem:[%s8 + $0x14] sm:$0xf]
  %v1812 = vld [vmem:[%s8 + $0x18] sm:$0xf]
  %v1813 = vld [vmem:[%s8 + $0x1c] sm:$0xf]
  %v1814 = vld [vmem:[%s8 + $0x20] sm:$0xf]
  %v1815 = vld [vmem:[%s8 + $0x24] sm:$0xf]
  %v1816 = vld [vmem:[%s8 + $0x28] sm:$0xf]
  %v1817 = vld [vmem:[%s8 + $0x2c] sm:$0xf]
  %v1818 = vld [vmem:[%s8 + $0x30] sm:$0xf]
  %v1819 = vld [vmem:[%s8 + $0x34] sm:$0xf]
  %v1820 = vld [vmem:[%s8 + $0x38] sm:$0xf]
  %v1821 = vld [vmem:[%s8 + $0x3c] sm:$0xf]
  %v1822 = vld [vmem:[%s2] sm:$0xff]
  %v1823 = vld [vmem:[%s2 + $0x8] sm:$0xff]
  %v1824 = vpack.c.bf16 %v1823, %v1822
  %v1825 = vld [vmem:[%s9] sm:$0xf]
  %v1826 = vld [vmem:[%s9 + $0x4] sm:$0xf]
  %v1827 = vld [vmem:[%s9 + $0x8] sm:$0xf]
  %v1828 = vld [vmem:[%s9 + $0xc] sm:$0xf]
  %v1829 = vld [vmem:[%s9 + $0x10] sm:$0xf]
  %v1830 = vld [vmem:[%s9 + $0x14] sm:$0xf]
  %v1831 = vld [vmem:[%s9 + $0x18] sm:$0xf]
  %v1832 = vld [vmem:[%s9 + $0x1c] sm:$0xf]
  %v1833 = vld [vmem:[%s9 + $0x20] sm:$0xf]
  %v1834 = vld [vmem:[%s9 + $0x24] sm:$0xf]
  %v1835 = vld [vmem:[%s9 + $0x28] sm:$0xf]
  %v1836 = vld [vmem:[%s9 + $0x2c] sm:$0xf]
  %v1837 = vld [vmem:[%s9 + $0x30] sm:$0xf]
  %v1838 = vld [vmem:[%s9 + $0x34] sm:$0xf]
  %v1839 = vld [vmem:[%s9 + $0x38] sm:$0xf]
  %v1840 = vld [vmem:[%s9 + $0x3c] sm:$0xf]
  %v1857 = vunpack.c.l.b16 %v1825
  %v1858 = vunpack.c.l.b16 %v1826
  %v1859 = vunpack.c.l.b16 %v1827
  %v1860 = vunpack.c.l.b16 %v1828
  %v1861 = vunpack.c.l.b16 %v1829
  %v1862 = vunpack.c.l.b16 %v1830
  %v1863 = vunpack.c.l.b16 %v1831
  %v1864 = vunpack.c.l.b16 %v1832
  %v1865 = vunpack.c.l.b16 %v1833
  %v1866 = vunpack.c.l.b16 %v1834
  %v1867 = vunpack.c.l.b16 %v1835
  %v1868 = vunpack.c.l.b16 %v1836
  %v1869 = vunpack.c.l.b16 %v1837
  %v1870 = vunpack.c.l.b16 %v1838
  %v1871 = vunpack.c.l.b16 %v1839
  %v1872 = vunpack.c.l.b16 %v1840
  %v1873 = vpack.c.b16 %v1858, %v1857
  %v1874 = vpack.c.b16 %v1860, %v1859
  %v1875 = vpack.c.b16 %v1862, %v1861
  %v1876 = vpack.c.b16 %v1864, %v1863
  %v1877 = vpack.c.b16 %v1866, %v1865
  %v1878 = vpack.c.b16 %v1868, %v1867
  %v1879 = vpack.c.b16 %v1870, %v1869
  %v1880 = vpack.c.b16 %v1872, %v1871
  %1889 = vmatprep.subr.bf16.mxu0 0
  %1890 = vmatpush1.bf16.msra.mxu0 %v1873
  %1891 = vmatprep.subr.bf16.mxu0 0
  %1892 = vmatpush1.bf16.msra.mxu0 %v1874
  %1893 = vmatprep.subr.bf16.mxu0 0
  %1894 = vmatpush1.bf16.msra.mxu0 %v1875
  %1895 = vmatprep.subr.bf16.mxu0 0
  %1896 = vmatpush1.bf16.msra.mxu0 %v1876
  %1897 = vmatprep.subr.bf16.mxu0 0
  %1898 = vmatpush1.bf16.msra.mxu0 %v1877
  %1899 = vmatprep.subr.bf16.mxu0 0
  %1900 = vmatpush1.bf16.msra.mxu0 %v1878
  %1901 = vmatprep.subr.bf16.mxu0 0
  %1902 = vmatpush1.bf16.msra.mxu0 %v1879
  %1903 = vmatprep.subr.bf16.mxu0 0
  %1904 = vmatpush1.bf16.msra.mxu0 %v1880
  %1905 = vmatprep.subr.bf16.mxu0 0
  %1906 = vmatpush1.bf16.msra.mxu0 0
  %1907 = vmatprep.subr.bf16.mxu0 0
  %1908 = vmatpush1.bf16.msra.mxu0 0
  %1909 = vmatprep.subr.bf16.mxu0 0
  %1910 = vmatpush1.bf16.msra.mxu0 0
  %1911 = vmatprep.subr.bf16.mxu0 0
  %1912 = vmatpush1.bf16.msra.mxu0 0
  %1913 = vmatprep.subr.bf16.mxu0 0
  %1914 = vmatpush1.bf16.msra.mxu0 0
  %1915 = vmatprep.subr.bf16.mxu0 0
  %1916 = vmatpush1.bf16.msra.mxu0 0
  %1917 = vmatprep.subr.bf16.mxu0 0
  %1918 = vmatpush1.bf16.msra.mxu0 0
  %1919 = vmatprep.subr.bf16.mxu0 0
  %1920 = vmatpush1.bf16.msra.mxu0 0
  %1921 = vmatprep.mubr.bf16.mxu0 0
  %1922 = vmatmul.mubr.bf16.gmra.mrb[0].mxu0 %v1824
  %v1923 = vpop.f32.mrb[0].mxu0
  %v1924 = vadd.f32 0.0, %v1923
  %v1925 = vpop.f32.mrb[0].mxu0
  %v1926 = vpop.f32.mrb[0].mxu0
  %v1927 = vadd.f32 0.0, %v1926
  %v1928 = vpop.f32.mrb[0].mxu0
  %1929 = vdwg.mxu0
  %v1946 = vunpack.c.l.b16 %v1806
  %v1947 = vunpack.c.l.b16 %v1807
  %v1948 = vunpack.c.l.b16 %v1808
  %v1949 = vunpack.c.l.b16 %v1809
  %v1950 = vunpack.c.l.b16 %v1810
  %v1951 = vunpack.c.l.b16 %v1811
  %v1952 = vunpack.c.l.b16 %v1812
  %v1953 = vunpack.c.l.b16 %v1813
  %v1954 = vunpack.c.l.b16 %v1814
  %v1955 = vunpack.c.l.b16 %v1815
  %v1956 = vunpack.c.l.b16 %v1816
  %v1957 = vunpack.c.l.b16 %v1817
  %v1958 = vunpack.c.l.b16 %v1818
  %v1959 = vunpack.c.l.b16 %v1819
  %v1960 = vunpack.c.l.b16 %v1820
  %v1961 = vunpack.c.l.b16 %v1821
  %v1962 = vpack.c.b16 %v1947, %v1946
  %v1963 = vpack.c.b16 %v1949, %v1948
  %v1964 = vpack.c.b16 %v1951, %v1950
  %v1965 = vpack.c.b16 %v1953, %v1952
  %v1966 = vpack.c.b16 %v1955, %v1954
  %v1967 = vpack.c.b16 %v1957, %v1956
  %v1968 = vpack.c.b16 %v1959, %v1958
  %v1969 = vpack.c.b16 %v1961, %v1960
  %1978 = vmatprep.subr.bf16.mxu0 0
  %1979 = vmatpush1.bf16.msra.mxu0 %v1962
  %1980 = vmatprep.subr.bf16.mxu0 0
  %1981 = vmatpush1.bf16.msra.mxu0 %v1963
  %1982 = vmatprep.subr.bf16.mxu0 0
  %1983 = vmatpush1.bf16.msra.mxu0 %v1964
  %1984 = vmatprep.subr.bf16.mxu0 0
  %1985 = vmatpush1.bf16.msra.mxu0 %v1965
  %1986 = vmatprep.subr.bf16.mxu0 0
  %1987 = vmatpush1.bf16.msra.mxu0 %v1966
  %1988 = vmatprep.subr.bf16.mxu0 0
  %1989 = vmatpush1.bf16.msra.mxu0 %v1967
  %1990 = vmatprep.subr.bf16.mxu0 0
  %1991 = vmatpush1.bf16.msra.mxu0 %v1968
  %1992 = vmatprep.subr.bf16.mxu0 0
  %1993 = vmatpush1.bf16.msra.mxu0 %v1969
  %1994 = vmatprep.subr.bf16.mxu0 0
  %1995 = vmatpush1.bf16.msra.mxu0 0
  %1996 = vmatprep.subr.bf16.mxu0 0
  %1997 = vmatpush1.bf16.msra.mxu0 0
  %1998 = vmatprep.subr.bf16.mxu0 0
  %1999 = vmatpush1.bf16.msra.mxu0 0
  %2000 = vmatprep.subr.bf16.mxu0 0
  %2001 = vmatpush1.bf16.msra.mxu0 0
  %2002 = vmatprep.subr.bf16.mxu0 0
  %2003 = vmatpush1.bf16.msra.mxu0 0
  %2004 = vmatprep.subr.bf16.mxu0 0
  %2005 = vmatpush1.bf16.msra.mxu0 0
  %2006 = vmatprep.subr.bf16.mxu0 0
  %2007 = vmatpush1.bf16.msra.mxu0 0
  %2008 = vmatprep.subr.bf16.mxu0 0
  %2009 = vmatpush1.bf16.msra.mxu0 0
  %2010 = vmatprep.mubr.bf16.mxu0 0
  %2011 = vmatmul.mubr.bf16.gmra.mrb[0].mxu0 %v1805
  %v2012 = vpop.f32.mrb[0].mxu0
  %v2013 = vadd.f32 %v1924, %v2012
  %v2014 = vpop.f32.mrb[0].mxu0
  %v2015 = vpop.f32.mrb[0].mxu0
  %v2016 = vadd.f32 %v1927, %v2015
  %v2017 = vpop.f32.mrb[0].mxu0
  %2018 = vdwg.mxu0
  %v2019 = vld [vmem:[%s10] sm:$0x1]
  %v2021 = vlaneseq
  %v2022 = vshrl.u32 %v2021, 7
  %v2023 = vsub.s32 0, %v2022
  %v2024 = vrot.slane %v2019, %v2023
  %v2026 = vadd.f32 %v2013, %v2024
  %v2027 = vadd.f32 %v2016, %v2024
  %v2028 = vmax.f32 %v2026, 0.0
  %v2029 = vmax.f32 %v2027, 0.0
  %v2030 = vpack.c.bf16 %v2029, %v2028
  %v2031 = vld [vmem:[%s11] sm:$0xf]
  %v2032 = vld [vmem:[%s11 + $0x4] sm:$0xf]
  %v2033 = vld [vmem:[%s11 + $0x8] sm:$0xf]
  %v2034 = vld [vmem:[%s11 + $0xc] sm:$0xf]
  %v2035 = vld [vmem:[%s11 + $0x10] sm:$0xf]
  %v2036 = vld [vmem:[%s11 + $0x14] sm:$0xf]
  %v2037 = vld [vmem:[%s11 + $0x18] sm:$0xf]
  %v2038 = vld [vmem:[%s11 + $0x1c] sm:$0xf]
  %v2039 = vld [vmem:[%s11 + $0x20] sm:$0xf]
  %v2040 = vld [vmem:[%s11 + $0x24] sm:$0xf]
  %v2041 = vld [vmem:[%s11 + $0x28] sm:$0xf]
  %v2042 = vld [vmem:[%s11 + $0x2c] sm:$0xf]
  %v2043 = vld [vmem:[%s11 + $0x30] sm:$0xf]
  %v2044 = vld [vmem:[%s11 + $0x34] sm:$0xf]
  %v2045 = vld [vmem:[%s11 + $0x38] sm:$0xf]
  %v2046 = vld [vmem:[%s11 + $0x3c] sm:$0xf]
  %v2047 = vld [vmem:[%s12] sm:$0x1]
  %v2049 = vlaneseq
  %v2050 = vshrl.u32 %v2049, 7
  %v2051 = vsub.s32 0, %v2050
  %v2052 = vrot.slane %v2047, %v2051
  %v2070 = vunpack.c.l.b16 %v2031
  %v2071 = vunpack.c.l.b16 %v2032
  %v2072 = vunpack.c.l.b16 %v2033
  %v2073 = vunpack.c.l.b16 %v2034
  %v2074 = vunpack.c.l.b16 %v2035
  %v2075 = vunpack.c.l.b16 %v2036
  %v2076 = vunpack.c.l.b16 %v2037
  %v2077 = vunpack.c.l.b16 %v2038
  %v2078 = vunpack.c.l.b16 %v2039
  %v2079 = vunpack.c.l.b16 %v2040
  %v2080 = vunpack.c.l.b16 %v2041
  %v2081 = vunpack.c.l.b16 %v2042
  %v2082 = vunpack.c.l.b16 %v2043
  %v2083 = vunpack.c.l.b16 %v2044
  %v2084 = vunpack.c.l.b16 %v2045
  %v2085 = vunpack.c.l.b16 %v2046
  %v2086 = vpack.c.b16 %v2071, %v2070
  %v2087 = vpack.c.b16 %v2073, %v2072
  %v2088 = vpack.c.b16 %v2075, %v2074
  %v2089 = vpack.c.b16 %v2077, %v2076
  %v2090 = vpack.c.b16 %v2079, %v2078
  %v2091 = vpack.c.b16 %v2081, %v2080
  %v2092 = vpack.c.b16 %v2083, %v2082
  %v2093 = vpack.c.b16 %v2085, %v2084
  %2102 = vmatprep.subr.bf16.mxu0 0
  %2103 = vmatpush1.bf16.msra.mxu0 %v2086
  %2104 = vmatprep.subr.bf16.mxu0 0
  %2105 = vmatpush1.bf16.msra.mxu0 %v2087
  %2106 = vmatprep.subr.bf16.mxu0 0
  %2107 = vmatpush1.bf16.msra.mxu0 %v2088
  %2108 = vmatprep.subr.bf16.mxu0 0
  %2109 = vmatpush1.bf16.msra.mxu0 %v2089
  %2110 = vmatprep.subr.bf16.mxu0 0
  %2111 = vmatpush1.bf16.msra.mxu0 %v2090
  %2112 = vmatprep.subr.bf16.mxu0 0
  %2113 = vmatpush1.bf16.msra.mxu0 %v2091
  %2114 = vmatprep.subr.bf16.mxu0 0
  %2115 = vmatpush1.bf16.msra.mxu0 %v2092
  %2116 = vmatprep.subr.bf16.mxu0 0
  %2117 = vmatpush1.bf16.msra.mxu0 %v2093
  %2118 = vmatprep.subr.bf16.mxu0 0
  %2119 = vmatpush1.bf16.msra.mxu0 0
  %2120 = vmatprep.subr.bf16.mxu0 0
  %2121 = vmatpush1.bf16.msra.mxu0 0
  %2122 = vmatprep.subr.bf16.mxu0 0
  %2123 = vmatpush1.bf16.msra.mxu0 0
  %2124 = vmatprep.subr.bf16.mxu0 0
  %2125 = vmatpush1.bf16.msra.mxu0 0
  %2126 = vmatprep.subr.bf16.mxu0 0
  %2127 = vmatpush1.bf16.msra.mxu0 0
  %2128 = vmatprep.subr.bf16.mxu0 0
  %2129 = vmatpush1.bf16.msra.mxu0 0
  %2130 = vmatprep.subr.bf16.mxu0 0
  %2131 = vmatpush1.bf16.msra.mxu0 0
  %2132 = vmatprep.subr.bf16.mxu0 0
  %2133 = vmatpush1.bf16.msra.mxu0 0
  %2134 = vmatprep.mubr.bf16.mxu0 0
  %2135 = vmatmul.mubr.bf16.gmra.mrb[0].mxu0 %v2030
  %v2136 = vpop.f32.mrb[0].mxu0
  %v2137 = vadd.f32 %v2052, %v2136
  %v2138 = vpop.f32.mrb[0].mxu0
  %v2139 = vpop.f32.mrb[0].mxu0
  %v2140 = vadd.f32 %v2052, %v2139
  %v2141 = vpop.f32.mrb[0].mxu0
  %2142 = vdwg.mxu0
  %v2143 = vld [vmem:[%s3] sm:$0xff]
  %v2144 = vld [vmem:[%s3 + $0x8] sm:$0xff]
  %vm2145 = vcmp.gt.s32.totalorder %v2143, 0
  %vm2146 = vcmp.gt.s32.totalorder %v2144, 0
  %v2147 = vsel %vm2145, -1e+30, %v2137
  %v2148 = vsel %vm2146, -1e+30, %v2140
  %2149 = vmax.xlane.f32.xlu0 %v2147
  %v2150 = vpop.xlane.xlu0 %2149
  %2151 = vmax.xlane.f32.xlu0 %v2148
  %v2152 = vpop.xlane.xlu0 %2151
  %v2153 = vsub.f32 %v2147, %v2150
  %v2154 = vsub.f32 %v2148, %v2152
  %v2155 = vmul.f32 %v2153, 1.442695
  %v2156 = vpow.pop %v2155
  %v2157 = vmul.f32 %v2154, 1.442695
  %v2158 = vpow.pop %v2157
  %2159 = vadd.xlane.f32.xlu0 %v2156
  %v2160 = vpop.xlane.xlu0 %2159
  %2161 = vadd.xlane.f32.xlu0 %v2158
  %v2162 = vpop.xlane.xlu0 %2161
  %v2163 = vrcp.pop %v2160
  %v2164 = vmul.f32 %v2156, %v2163
  %v2165 = vrcp.pop %v2162
  %v2166 = vmul.f32 %v2158, %v2165
  %2167 = vst [vmem:[%s13] sm:$0xff] %v2164
  %2168 = vst [vmem:[%s13 + $0x8] sm:$0xff] %v2166
  // Predicated region
  $region54: #{policy_forward.1} parent=0 // pred_check
    _
  $region55: #{policy_forward.1} parent=0 // pred_check_branch
    %2170 = sbr.rel (0) target = $region57
  $region56: #{policy_forward.1} parent=0 // pred_region
    _
  $region57: #{policy_forward.1} parent=0 // pred_fallthru
    _
  // Predicated region
  $region58: #{policy_forward.1} parent=0 // pred_check
    _
  $region59: #{policy_forward.1} parent=0 // pred_check_branch
    %2172 = sbr.rel (0) target = $region61
  $region60: #{policy_forward.1} parent=0 // pred_region
    _
  $region61: #{policy_forward.1} parent=0 // pred_fallthru
    _

</llo_original>
